<compile_context>
chip_gen: v7x
topology: tpu7x:2x2x1
jax: 0.10.0
libtpu: 0.0.40
codegen_flags: <defaults>
</compile_context>

<pallas_src>
import jax
import jax.numpy as jnp
from jax.experimental import pallas as pl
from jax.experimental.pallas import tpu as pltpu


# ----------------------------- Pallas kernel ------------------------------- #

def _daub_fused_kernel(alpha_ref, colsel_ref, w_ref, shift_ref, x_ref, o_ref):
    """One grid step = td input-depth slices of one sample, fully fused.

    alpha_ref : SMEM (1,) f32                PReLU slope
    colsel_ref: VMEM (1, L) int32            (jj & 1) * 2 + (ll & 1) per lane
    w_ref     : VMEM (1, 8*Coutp, Cin) bf16  tap-major weights, per-sample
                                             inv_std already folded in
    shift_ref : VMEM (1, Coutp, 1) f32       -mean * inv_std  per (n, co)
    x_ref     : VMEM (1, 1, Cin, td*L) bf16  x duplicated 2x in H/W, td depth
                                             planes merged into lanes
    o_ref     : VMEM (1, td, 2, Coutp, L)    output block; each (Coutp, L)
                                             plane is one dense store
    """
    td = o_ref.shape[1]
    coutp = o_ref.shape[3]
    L = o_ref.shape[4]

    a = alpha_ref[0]
    colsel = colsel_ref[...]                              # (1, L) int32
    # loop-invariant VPU work hoisted out of the il/ki loops
    m01 = jnp.broadcast_to(colsel == 1, (coutp, L))       # jj even, ll odd
    m11 = jnp.broadcast_to(colsel == 3, (coutp, L))       # jj odd,  ll odd
    modd = jnp.broadcast_to(colsel >= 2, (coutp, L))      # jj odd
    shift = jnp.broadcast_to(shift_ref[0], (coutp, L))    # (Coutp, L)

    w = w_ref[0]                                          # (8*Coutp, Cin) bf16
    x2 = x_ref[0, 0]                                      # (Cin, td*L)   bf16

    # ONE wide MXU matmul per grid step: all 8 taps x all td depth planes.
    y = jnp.dot(w, x2, preferred_element_type=jnp.float32)   # (8*Coutp, td*L)

    for il in range(td):                                  # static unroll
        ysl = y[:, il * L:(il + 1) * L]                   # lane-tile aligned slice
        for ki in range(2):
            base = ki * 4 * coutp                         # tap t = ki*4 + kj*2 + kk
            p00 = ysl[base + 0 * coutp: base + 1 * coutp, :]   # kj=0, kk=0
            p01 = ysl[base + 1 * coutp: base + 2 * coutp, :]   # kj=0, kk=1
            p10 = ysl[base + 2 * coutp: base + 3 * coutp, :]   # kj=1, kk=0
            p11 = ysl[base + 3 * coutp: base + 4 * coutp, :]   # kj=1, kk=1
            row_even = jnp.where(m01, p01, p00)
            row_odd = jnp.where(m11, p11, p10)
            xhat = jnp.where(modd, row_odd, row_even) + shift  # fused inst-norm
            outv = jnp.where(xhat >= 0, xhat, a * xhat)        # PReLU
            o_ref[0, il, ki, :, :] = outv.astype(o_ref.dtype)  # dense plane store


# ------------------------------ JAX wrapper -------------------------------- #

def _vmem_limit_bytes():
    """Generation-aware scoped-VMEM limit (v7x has only 64 MiB physical)."""
    try:
        cap = pltpu.get_tpu_info().vmem_capacity_bytes
    except Exception:
        cap = 64 * 1024 * 1024             # safe lower bound (v7x per-core)
    return int(min(cap * 3 // 4, 96 * 1024 * 1024))


def _pick_depth_tile(n, d, cin, coutp, L, budget_bytes):
    """Largest divisor of D whose double-buffered blocks fit the VMEM budget."""
    if L % 128 != 0:
        return 1                           # keep per-step lane width = L (no mid-tile slicing)
    pad128 = lambda v: -(-v // 128) * 128
    cin_pad = -(-cin // 16) * 16           # bf16 sublane packing
    best = 1
    for td in range(1, min(d, 16) + 1):    # cap static unroll
        if d % td:
            continue
        in_bytes = cin_pad * pad128(td * L) * 2            # bf16 x block
        out_bytes = td * 2 * coutp * pad128(L) * 4         # f32 output block
        y_bytes = 8 * coutp * pad128(td * L) * 4           # matmul temp in VMEM
        if 2 * (in_bytes + out_bytes) + y_bytes > budget_bytes:
            continue
        if n == 1 and d > 1 and td == d:
            continue                       # keep >=2 parallel blocks (dual-TC v7x)
        best = td
    return best


def daub_forward(x, weight, alpha, eps=1e-5):
    """ConvTranspose3d(k=2,s=2,bias=False) -> InstanceNorm3d(affine=False) -> PReLU."""
    N, Cin, D, H, W = x.shape
    Cout = weight.shape[1]
    Coutp = -(-Cout // 8) * 8              # pad channels to a sublane-tile multiple
    S = D * H * W
    L = 4 * H * W                          # one (2H, 2W) output plane, flattened
    hi = jax.lax.Precision.HIGHEST

    xf = x.astype(jnp.float32)
    wf = weight.astype(jnp.float32)

    # --- analytic instance-norm stats from tiny per-sample input moments ---- #
    # centered form: var = (1/8) sum_t w_t^T Cov w_t + Var_t(w_t . mean_x)
    x2d = xf.reshape(N, Cin, S)
    mean_x = jnp.mean(x2d, axis=-1)                                      # (N, Cin)
    m2 = jnp.einsum('nas,nbs->nab', x2d, x2d, precision=hi) / S          # (N,Cin,Cin)
    cov = m2 - mean_x[:, :, None] * mean_x[:, None, :]

    w_taps = jnp.transpose(wf, (2, 3, 4, 0, 1)).reshape(8, Cin, Cout)    # (t,ci,co)
    if Coutp != Cout:
        w_taps = jnp.pad(w_taps, ((0, 0), (0, 0), (0, Coutp - Cout)))

    a_t = jnp.einsum('na,tac->ntc', mean_x, w_taps, precision=hi)        # (N,8,Coutp)
    mean_y = jnp.mean(a_t, axis=1)                                       # (N, Coutp)
    quad = jnp.einsum('tac,nab,tbc->nc', w_taps, cov, w_taps, precision=hi) / 8.0
    var_t = jnp.mean((a_t - mean_y[:, None, :]) ** 2, axis=1)
    var = jnp.maximum(quad + var_t, 0.0)                                 # biased var
    inv_std = jax.lax.rsqrt(var + eps)
    shift = (-mean_y * inv_std).reshape(N, Coutp, 1)

    # per-sample, inv_std-folded, tap-major weights (row = t*Coutp + co), bf16
    w_mat = jnp.transpose(w_taps, (0, 2, 1)).reshape(8 * Coutp, Cin)
    w_scaled = (w_mat[None] * jnp.tile(inv_std, (1, 8))[:, :, None]).astype(jnp.bfloat16)

    # --- x duplicated 2x along H/W; td depth planes merged into lanes ------- #
    vmem_limit = _vmem_limit_bytes()
    td = _pick_depth_tile(N, D, Cin, Coutp, L, budget_bytes=vmem_limit // 2)
    G = D // td

    xt = jnp.transpose(xf, (0, 2, 1, 3, 4)).astype(jnp.bfloat16)         # (N,D,Cin,H,W)
    x_dup = jnp.repeat(jnp.repeat(xt, 2, axis=3), 2, axis=4)             # (N,D,Cin,2H,2W)
    x_wide = (x_dup.reshape(N, G, td, Cin, L)
                   .transpose(0, 1, 3, 2, 4)
                   .reshape(N, G, Cin, td * L))
    # TODO(synk): for decoder-sized Cin the 4x lane-duplication of x should be
    # replaced by in-kernel tap-plane expansion (rolls/selects); at tiny Cin it
    # is negligible.

    # per-lane tap selector: (jj & 1) * 2 + (ll & 1) for lane index jj*2W + ll
    jj = jnp.arange(2 * H, dtype=jnp.int32)[:, None]
    ll = jnp.arange(2 * W, dtype=jnp.int32)[None, :]
    colsel = ((jj % 2) * 2 + (ll % 2)).reshape(1, L)

    alpha1 = jnp.asarray(alpha, jnp.float32).reshape(1)

    out6 = pl.pallas_call(
        _daub_fused_kernel,
        out_shape=jax.ShapeDtypeStruct((N, D, 2, Coutp, L), jnp.float32),
        grid=(N, G),
        in_specs=[
            pl.BlockSpec(memory_space=pltpu.MemorySpace.SMEM),             # alpha
            pl.BlockSpec((1, L), lambda n, g: (0, 0)),                     # colsel
            pl.BlockSpec((1, 8 * Coutp, Cin), lambda n, g: (n, 0, 0)),     # weights
            pl.BlockSpec((1, Coutp, 1), lambda n, g: (n, 0, 0)),           # shift
            pl.BlockSpec((1, 1, Cin, td * L), lambda n, g: (n, g, 0, 0)),  # x
        ],
        out_specs=pl.BlockSpec((1, td, 2, Coutp, L),
                               lambda n, g: (n, g, 0, 0, 0)),
        compiler_params=pltpu.CompilerParams(
            dimension_semantics=("parallel", "parallel"),
            vmem_limit_bytes=vmem_limit,
        ),
    )(alpha1, colsel, w_scaled, shift, x_wide)

    # major-dim permute only (lane dim untouched), then free reshapes
    out = jnp.transpose(out6, (0, 3, 1, 2, 4))            # (N, Coutp, D, 2, L)
    out = out.reshape(N, Coutp, 2 * D, 2 * H, 2 * W)[:, :Cout]
    return out.astype(x.dtype)


# ------------------------- pure-JAX reference ------------------------------ #

def daub_reference(x, weight, alpha, eps=1e-5):
    N, Cin, D, H, W = x.shape
    Cout = weight.shape[1]
    hi = jax.lax.Precision.HIGHEST
    y = jnp.einsum('ncdhw,copqr->nodphqwr', x.astype(jnp.float32),
                   weight.astype(jnp.float32), precision=hi)
    y = y.reshape(N, Cout, 2 * D, 2 * H, 2 * W)
    m = jnp.mean(y, axis=(2, 3, 4), keepdims=True)
    v = jnp.mean((y - m) ** 2, axis=(2, 3, 4), keepdims=True)
    yn = (y - m) * jax.lax.rsqrt(v + eps)
    return jnp.where(yn >= 0, yn, alpha * yn)


# --------------------------------- module ---------------------------------- #

class DAUBPallas:
    """Pallas port of DAUB: convT(k=2,s=2) -> InstanceNorm -> PReLU."""

    def __init__(self, in_c, emb_dim, out_c, kernel=3, spatial_dims=3,
                 norm_name="instance", key=None):
        assert spatial_dims == 3, "this port implements the default spatial_dims=3"
        del emb_dim, kernel, norm_name   # unused in the forward path
        if key is None:
            key = jax.random.PRNGKey(0)
        fan_in = in_c * 2 * 2 * 2
        bound = 1.0 / (fan_in ** 0.5)
        # ConvTranspose3d weight layout: (in_c, out_c, 2, 2, 2)
        self.weight = jax.random.uniform(
            key, (in_c, out_c, 2, 2, 2), jnp.float32, -bound, bound)
        # PReLU default shared parameter (init=0.25)
        self.alpha = jnp.array([0.25], dtype=jnp.float32)
        self._fwd = jax.jit(daub_forward)
        # Note: monai's get_conv_layer defaults to bias=False for the conv;
        # even with a bias, the affine-free instance norm cancels it exactly.

    def __call__(self, x):
        return self._fwd(x, self.weight, self.alpha)


# ---------------------------------- main ----------------------------------- #

if __name__ == "__main__":
    key = jax.random.PRNGKey(0)
    kx, kw = jax.random.split(key)

    # small NCDHW input: batch=2, in_c=4, out_c=8, spatial 8^3
    N, Cin, D, H, W = 2, 4, 8, 8, 8
    Cout = 8
    x = jax.random.normal(kx, (N, Cin, D, H, W), dtype=jnp.float32)

    model = DAUBPallas(in_c=Cin, emb_dim=32, out_c=Cout, key=kw)
    out = jax.block_until_ready(model(x))

    assert out.shape == (N, Cout, 2 * D, 2 * H, 2 * W), out.shape
    assert bool(jnp.all(jnp.isfinite(out)))

    ref = jax.block_until_ready(daub_reference(x, model.weight, model.alpha))
    max_err = float(jnp.max(jnp.abs(out - ref)))
    # bf16 MXU operands + analytic-moment stats vs exact f32 HIGHEST reference
    assert max_err < 1e-1, f"max abs error vs reference: {max_err}"

    print("KERNEL_OK")
</pallas_src>

<mosaic_0001>
module attributes {stable_mosaic.version = 11 : i64} {
  func.func @_daub_fused_kernel(%arg0: i32, %arg1: i32, %arg2: memref<1xf32, #tpu.memory_space<smem>>, %arg3: memref<1x256xi32, #tpu.memory_space<vmem>>, %arg4: memref<1x64x4xbf16, #tpu.memory_space<vmem>>, %arg5: memref<1x8x1xf32, #tpu.memory_space<vmem>>, %arg6: memref<1x1x4x2048xbf16, #tpu.memory_space<vmem>>, %arg7: memref<1x8x2x8x256xf32, #tpu.memory_space<vmem>>) attributes {dimension_semantics = [#tpu.dimension_semantics<parallel>, #tpu.dimension_semantics<parallel>], iteration_bounds = array<i64: 2, 1>, scalar_prefetch = 0 : i64, scratch_operands = 0 : i64, tpu.core_type = #tpu.core_type<tc>, window_params = [{transform_indices = @transform_0, window_bounds = array<i64: 1>}, {pipeline_mode = #tpu.pipeline_mode<synchronous>, transform_indices = @transform_1, window_bounds = array<i64: 1, 256>}, {transform_indices = @transform_2, window_bounds = array<i64: 1, 64, 4>}, {transform_indices = @transform_3, window_bounds = array<i64: 1, 8, 1>}, {transform_indices = @transform_4, window_bounds = array<i64: 1, 1, 4, 2048>}, {transform_indices = @transform_5, window_bounds = array<i64: 1, 8, 2, 8, 256>}]} {
    %c0 = arith.constant 0 : index
    %0 = memref.load %arg2[%c0] : memref<1xf32, #tpu.memory_space<smem>>
    %c0_0 = arith.constant 0 : index
    %c0_1 = arith.constant 0 : index
    %1 = vector.load %arg3[%c0_0, %c0_1] : memref<1x256xi32, #tpu.memory_space<vmem>>, vector<1x256xi32>
    %c1_i32 = arith.constant 1 : i32
    %2 = vector.broadcast %c1_i32 : i32 to vector<1x256xi32>
    %3 = arith.cmpi eq, %1, %2 : vector<1x256xi32>
    %4 = vector.shape_cast %3 : vector<1x256xi1> to vector<1x256xi1>
    %5 = vector.broadcast %4 : vector<1x256xi1> to vector<8x256xi1>
    %c3_i32 = arith.constant 3 : i32
    %6 = vector.broadcast %c3_i32 : i32 to vector<1x256xi32>
    %7 = arith.cmpi eq, %1, %6 : vector<1x256xi32>
    %8 = vector.shape_cast %7 : vector<1x256xi1> to vector<1x256xi1>
    %9 = vector.broadcast %8 : vector<1x256xi1> to vector<8x256xi1>
    %c2_i32 = arith.constant 2 : i32
    %10 = vector.broadcast %c2_i32 : i32 to vector<1x256xi32>
    %11 = arith.cmpi sge, %1, %10 : vector<1x256xi32>
    %12 = vector.shape_cast %11 : vector<1x256xi1> to vector<1x256xi1>
    %13 = vector.broadcast %12 : vector<1x256xi1> to vector<8x256xi1>
    %c0_2 = arith.constant 0 : index
    %c0_3 = arith.constant 0 : index
    %c0_4 = arith.constant 0 : index
    %14 = vector.load %arg5[%c0_2, %c0_3, %c0_4] : memref<1x8x1xf32, #tpu.memory_space<vmem>>, vector<1x8x1xf32>
    %15 = vector.shape_cast %14 : vector<1x8x1xf32> to vector<8x1xf32>
    %16 = vector.shape_cast %15 : vector<8x1xf32> to vector<8x1xf32>
    %17 = vector.broadcast %16 : vector<8x1xf32> to vector<8x256xf32>
    %c0_5 = arith.constant 0 : index
    %c0_6 = arith.constant 0 : index
    %c0_7 = arith.constant 0 : index
    %18 = vector.load %arg4[%c0_5, %c0_6, %c0_7] : memref<1x64x4xbf16, #tpu.memory_space<vmem>>, vector<1x64x4xbf16>
    %19 = vector.shape_cast %18 : vector<1x64x4xbf16> to vector<64x4xbf16>
    %c0_8 = arith.constant 0 : index
    %c0_9 = arith.constant 0 : index
    %c0_10 = arith.constant 0 : index
    %c0_11 = arith.constant 0 : index
    %20 = vector.load %arg6[%c0_8, %c0_9, %c0_10, %c0_11] : memref<1x1x4x2048xbf16, #tpu.memory_space<vmem>>, vector<1x1x4x2048xbf16>
    %21 = vector.shape_cast %20 : vector<1x1x4x2048xbf16> to vector<4x2048xbf16>
    %cst = arith.constant dense<0.000000e+00> : vector<64x2048xf32>
    %22 = tpu.matmul %19, %21, %cst {dimension_numbers = #tpu.dot_dimension_numbers<[1], [0], [0], [1], [0, 0, 1, 1], [], []>} : vector<64x4xbf16>, vector<4x2048xbf16>, vector<64x2048xf32> -> vector<64x2048xf32>
    %23 = vector.extract_strided_slice %22 {offsets = [0, 0], sizes = [64, 256], strides = [1, 1]} : vector<64x2048xf32> to vector<64x256xf32>
    %24 = vector.extract_strided_slice %23 {offsets = [0, 0], sizes = [8, 256], strides = [1, 1]} : vector<64x256xf32> to vector<8x256xf32>
    %25 = vector.extract_strided_slice %23 {offsets = [8, 0], sizes = [8, 256], strides = [1, 1]} : vector<64x256xf32> to vector<8x256xf32>
    %26 = vector.extract_strided_slice %23 {offsets = [16, 0], sizes = [8, 256], strides = [1, 1]} : vector<64x256xf32> to vector<8x256xf32>
    %27 = vector.extract_strided_slice %23 {offsets = [24, 0], sizes = [8, 256], strides = [1, 1]} : vector<64x256xf32> to vector<8x256xf32>
    %28 = arith.select %5, %25, %24 : vector<8x256xi1>, vector<8x256xf32>
    %29 = arith.select %9, %27, %26 : vector<8x256xi1>, vector<8x256xf32>
    %30 = arith.select %13, %29, %28 : vector<8x256xi1>, vector<8x256xf32>
    %31 = arith.addf %30, %17 : vector<8x256xf32>
    %cst_12 = arith.constant 0.000000e+00 : f32
    %32 = vector.broadcast %cst_12 : f32 to vector<8x256xf32>
    %33 = arith.cmpf oge, %31, %32 : vector<8x256xf32>
    %34 = vector.broadcast %0 : f32 to vector<8x256xf32>
    %35 = arith.mulf %34, %31 : vector<8x256xf32>
    %36 = arith.select %33, %31, %35 : vector<8x256xi1>, vector<8x256xf32>
    %c0_13 = arith.constant 0 : index
    %c0_14 = arith.constant 0 : index
    %c0_15 = arith.constant 0 : index
    %c0_16 = arith.constant 0 : index
    %c0_17 = arith.constant 0 : index
    %37 = vector.load %arg7[%c0_13, %c0_14, %c0_15, %c0_16, %c0_17] : memref<1x8x2x8x256xf32, #tpu.memory_space<vmem>>, vector<1x1x1x8x256xf32>
    %38 = vector.shape_cast %37 : vector<1x1x1x8x256xf32> to vector<8x256xf32>
    %39 = vector.shape_cast %36 : vector<8x256xf32> to vector<1x1x1x8x256xf32>
    tpu.vector_store %arg7[%c0_13, %c0_14, %c0_15, %c0_16, %c0_17], %39 {strides = array<i32>} : memref<1x8x2x8x256xf32, #tpu.memory_space<vmem>>, vector<1x1x1x8x256xf32>,
    %40 = vector.extract_strided_slice %23 {offsets = [32, 0], sizes = [8, 256], strides = [1, 1]} : vector<64x256xf32> to vector<8x256xf32>
    %41 = vector.extract_strided_slice %23 {offsets = [40, 0], sizes = [8, 256], strides = [1, 1]} : vector<64x256xf32> to vector<8x256xf32>
    %42 = vector.extract_strided_slice %23 {offsets = [48, 0], sizes = [8, 256], strides = [1, 1]} : vector<64x256xf32> to vector<8x256xf32>
    %43 = vector.extract_strided_slice %23 {offsets = [56, 0], sizes = [8, 256], strides = [1, 1]} : vector<64x256xf32> to vector<8x256xf32>
    %44 = arith.select %5, %41, %40 : vector<8x256xi1>, vector<8x256xf32>
    %45 = arith.select %9, %43, %42 : vector<8x256xi1>, vector<8x256xf32>
    %46 = arith.select %13, %45, %44 : vector<8x256xi1>, vector<8x256xf32>
    %47 = arith.addf %46, %17 : vector<8x256xf32>
    %cst_18 = arith.constant 0.000000e+00 : f32
    %48 = vector.broadcast %cst_18 : f32 to vector<8x256xf32>
    %49 = arith.cmpf oge, %47, %48 : vector<8x256xf32>
    %50 = vector.broadcast %0 : f32 to vector<8x256xf32>
    %51 = arith.mulf %50, %47 : vector<8x256xf32>
    %52 = arith.select %49, %47, %51 : vector<8x256xi1>, vector<8x256xf32>
    %c0_19 = arith.constant 0 : index
    %c0_20 = arith.constant 0 : index
    %c1 = arith.constant 1 : index
    %c0_21 = arith.constant 0 : index
    %c0_22 = arith.constant 0 : index
    %53 = vector.load %arg7[%c0_19, %c0_20, %c1, %c0_21, %c0_22] : memref<1x8x2x8x256xf32, #tpu.memory_space<vmem>>, vector<1x1x1x8x256xf32>
    %54 = vector.shape_cast %53 : vector<1x1x1x8x256xf32> to vector<8x256xf32>
    %55 = vector.shape_cast %52 : vector<8x256xf32> to vector<1x1x1x8x256xf32>
    tpu.vector_store %arg7[%c0_19, %c0_20, %c1, %c0_21, %c0_22], %55 {strides = array<i32>} : memref<1x8x2x8x256xf32, #tpu.memory_space<vmem>>, vector<1x1x1x8x256xf32>,
    %56 = vector.extract_strided_slice %22 {offsets = [0, 256], sizes = [64, 256], strides = [1, 1]} : vector<64x2048xf32> to vector<64x256xf32>
    %57 = vector.extract_strided_slice %56 {offsets = [0, 0], sizes = [8, 256], strides = [1, 1]} : vector<64x256xf32> to vector<8x256xf32>
    %58 = vector.extract_strided_slice %56 {offsets = [8, 0], sizes = [8, 256], strides = [1, 1]} : vector<64x256xf32> to vector<8x256xf32>
    %59 = vector.extract_strided_slice %56 {offsets = [16, 0], sizes = [8, 256], strides = [1, 1]} : vector<64x256xf32> to vector<8x256xf32>
    %60 = vector.extract_strided_slice %56 {offsets = [24, 0], sizes = [8, 256], strides = [1, 1]} : vector<64x256xf32> to vector<8x256xf32>
    %61 = arith.select %5, %58, %57 : vector<8x256xi1>, vector<8x256xf32>
    %62 = arith.select %9, %60, %59 : vector<8x256xi1>, vector<8x256xf32>
    %63 = arith.select %13, %62, %61 : vector<8x256xi1>, vector<8x256xf32>
    %64 = arith.addf %63, %17 : vector<8x256xf32>
    %cst_23 = arith.constant 0.000000e+00 : f32
    %65 = vector.broadcast %cst_23 : f32 to vector<8x256xf32>
    %66 = arith.cmpf oge, %64, %65 : vector<8x256xf32>
    %67 = vector.broadcast %0 : f32 to vector<8x256xf32>
    %68 = arith.mulf %67, %64 : vector<8x256xf32>
    %69 = arith.select %66, %64, %68 : vector<8x256xi1>, vector<8x256xf32>
    %c0_24 = arith.constant 0 : index
    %c1_25 = arith.constant 1 : index
    %c0_26 = arith.constant 0 : index
    %c0_27 = arith.constant 0 : index
    %c0_28 = arith.constant 0 : index
    %70 = vector.load %arg7[%c0_24, %c1_25, %c0_26, %c0_27, %c0_28] : memref<1x8x2x8x256xf32, #tpu.memory_space<vmem>>, vector<1x1x1x8x256xf32>
    %71 = vector.shape_cast %70 : vector<1x1x1x8x256xf32> to vector<8x256xf32>
    %72 = vector.shape_cast %69 : vector<8x256xf32> to vector<1x1x1x8x256xf32>
    tpu.vector_store %arg7[%c0_24, %c1_25, %c0_26, %c0_27, %c0_28], %72 {strides = array<i32>} : memref<1x8x2x8x256xf32, #tpu.memory_space<vmem>>, vector<1x1x1x8x256xf32>,
    %73 = vector.extract_strided_slice %56 {offsets = [32, 0], sizes = [8, 256], strides = [1, 1]} : vector<64x256xf32> to vector<8x256xf32>
    %74 = vector.extract_strided_slice %56 {offsets = [40, 0], sizes = [8, 256], strides = [1, 1]} : vector<64x256xf32> to vector<8x256xf32>
    %75 = vector.extract_strided_slice %56 {offsets = [48, 0], sizes = [8, 256], strides = [1, 1]} : vector<64x256xf32> to vector<8x256xf32>
    %76 = vector.extract_strided_slice %56 {offsets = [56, 0], sizes = [8, 256], strides = [1, 1]} : vector<64x256xf32> to vector<8x256xf32>
    %77 = arith.select %5, %74, %73 : vector<8x256xi1>, vector<8x256xf32>
    %78 = arith.select %9, %76, %75 : vector<8x256xi1>, vector<8x256xf32>
    %79 = arith.select %13, %78, %77 : vector<8x256xi1>, vector<8x256xf32>
    %80 = arith.addf %79, %17 : vector<8x256xf32>
    %cst_29 = arith.constant 0.000000e+00 : f32
    %81 = vector.broadcast %cst_29 : f32 to vector<8x256xf32>
    %82 = arith.cmpf oge, %80, %81 : vector<8x256xf32>
    %83 = vector.broadcast %0 : f32 to vector<8x256xf32>
    %84 = arith.mulf %83, %80 : vector<8x256xf32>
    %85 = arith.select %82, %80, %84 : vector<8x256xi1>, vector<8x256xf32>
    %c0_30 = arith.constant 0 : index
    %c1_31 = arith.constant 1 : index
    %c1_32 = arith.constant 1 : index
    %c0_33 = arith.constant 0 : index
    %c0_34 = arith.constant 0 : index
    %86 = vector.load %arg7[%c0_30, %c1_31, %c1_32, %c0_33, %c0_34] : memref<1x8x2x8x256xf32, #tpu.memory_space<vmem>>, vector<1x1x1x8x256xf32>
    %87 = vector.shape_cast %86 : vector<1x1x1x8x256xf32> to vector<8x256xf32>
    %88 = vector.shape_cast %85 : vector<8x256xf32> to vector<1x1x1x8x256xf32>
    tpu.vector_store %arg7[%c0_30, %c1_31, %c1_32, %c0_33, %c0_34], %88 {strides = array<i32>} : memref<1x8x2x8x256xf32, #tpu.memory_space<vmem>>, vector<1x1x1x8x256xf32>,
    %89 = vector.extract_strided_slice %22 {offsets = [0, 512], sizes = [64, 256], strides = [1, 1]} : vector<64x2048xf32> to vector<64x256xf32>
    %90 = vector.extract_strided_slice %89 {offsets = [0, 0], sizes = [8, 256], strides = [1, 1]} : vector<64x256xf32> to vector<8x256xf32>
    %91 = vector.extract_strided_slice %89 {offsets = [8, 0], sizes = [8, 256], strides = [1, 1]} : vector<64x256xf32> to vector<8x256xf32>
    %92 = vector.extract_strided_slice %89 {offsets = [16, 0], sizes = [8, 256], strides = [1, 1]} : vector<64x256xf32> to vector<8x256xf32>
    %93 = vector.extract_strided_slice %89 {offsets = [24, 0], sizes = [8, 256], strides = [1, 1]} : vector<64x256xf32> to vector<8x256xf32>
    %94 = arith.select %5, %91, %90 : vector<8x256xi1>, vector<8x256xf32>
    %95 = arith.select %9, %93, %92 : vector<8x256xi1>, vector<8x256xf32>
    %96 = arith.select %13, %95, %94 : vector<8x256xi1>, vector<8x256xf32>
    %97 = arith.addf %96, %17 : vector<8x256xf32>
    %cst_35 = arith.constant 0.000000e+00 : f32
    %98 = vector.broadcast %cst_35 : f32 to vector<8x256xf32>
    %99 = arith.cmpf oge, %97, %98 : vector<8x256xf32>
    %100 = vector.broadcast %0 : f32 to vector<8x256xf32>
    %101 = arith.mulf %100, %97 : vector<8x256xf32>
    %102 = arith.select %99, %97, %101 : vector<8x256xi1>, vector<8x256xf32>
    %c0_36 = arith.constant 0 : index
    %c2 = arith.constant 2 : index
    %c0_37 = arith.constant 0 : index
    %c0_38 = arith.constant 0 : index
    %c0_39 = arith.constant 0 : index
    %103 = vector.load %arg7[%c0_36, %c2, %c0_37, %c0_38, %c0_39] : memref<1x8x2x8x256xf32, #tpu.memory_space<vmem>>, vector<1x1x1x8x256xf32>
    %104 = vector.shape_cast %103 : vector<1x1x1x8x256xf32> to vector<8x256xf32>
    %105 = vector.shape_cast %102 : vector<8x256xf32> to vector<1x1x1x8x256xf32>
    tpu.vector_store %arg7[%c0_36, %c2, %c0_37, %c0_38, %c0_39], %105 {strides = array<i32>} : memref<1x8x2x8x256xf32, #tpu.memory_space<vmem>>, vector<1x1x1x8x256xf32>,
    %106 = vector.extract_strided_slice %89 {offsets = [32, 0], sizes = [8, 256], strides = [1, 1]} : vector<64x256xf32> to vector<8x256xf32>
    %107 = vector.extract_strided_slice %89 {offsets = [40, 0], sizes = [8, 256], strides = [1, 1]} : vector<64x256xf32> to vector<8x256xf32>
    %108 = vector.extract_strided_slice %89 {offsets = [48, 0], sizes = [8, 256], strides = [1, 1]} : vector<64x256xf32> to vector<8x256xf32>
    %109 = vector.extract_strided_slice %89 {offsets = [56, 0], sizes = [8, 256], strides = [1, 1]} : vector<64x256xf32> to vector<8x256xf32>
    %110 = arith.select %5, %107, %106 : vector<8x256xi1>, vector<8x256xf32>
    %111 = arith.select %9, %109, %108 : vector<8x256xi1>, vector<8x256xf32>
    %112 = arith.select %13, %111, %110 : vector<8x256xi1>, vector<8x256xf32>
    %113 = arith.addf %112, %17 : vector<8x256xf32>
    %cst_40 = arith.constant 0.000000e+00 : f32
    %114 = vector.broadcast %cst_40 : f32 to vector<8x256xf32>
    %115 = arith.cmpf oge, %113, %114 : vector<8x256xf32>
    %116 = vector.broadcast %0 : f32 to vector<8x256xf32>
    %117 = arith.mulf %116, %113 : vector<8x256xf32>
    %118 = arith.select %115, %113, %117 : vector<8x256xi1>, vector<8x256xf32>
    %c0_41 = arith.constant 0 : index
    %c2_42 = arith.constant 2 : index
    %c1_43 = arith.constant 1 : index
    %c0_44 = arith.constant 0 : index
    %c0_45 = arith.constant 0 : index
    %119 = vector.load %arg7[%c0_41, %c2_42, %c1_43, %c0_44, %c0_45] : memref<1x8x2x8x256xf32, #tpu.memory_space<vmem>>, vector<1x1x1x8x256xf32>
    %120 = vector.shape_cast %119 : vector<1x1x1x8x256xf32> to vector<8x256xf32>
    %121 = vector.shape_cast %118 : vector<8x256xf32> to vector<1x1x1x8x256xf32>
    tpu.vector_store %arg7[%c0_41, %c2_42, %c1_43, %c0_44, %c0_45], %121 {strides = array<i32>} : memref<1x8x2x8x256xf32, #tpu.memory_space<vmem>>, vector<1x1x1x8x256xf32>,
    %122 = vector.extract_strided_slice %22 {offsets = [0, 768], sizes = [64, 256], strides = [1, 1]} : vector<64x2048xf32> to vector<64x256xf32>
    %123 = vector.extract_strided_slice %122 {offsets = [0, 0], sizes = [8, 256], strides = [1, 1]} : vector<64x256xf32> to vector<8x256xf32>
    %124 = vector.extract_strided_slice %122 {offsets = [8, 0], sizes = [8, 256], strides = [1, 1]} : vector<64x256xf32> to vector<8x256xf32>
    %125 = vector.extract_strided_slice %122 {offsets = [16, 0], sizes = [8, 256], strides = [1, 1]} : vector<64x256xf32> to vector<8x256xf32>
    %126 = vector.extract_strided_slice %122 {offsets = [24, 0], sizes = [8, 256], strides = [1, 1]} : vector<64x256xf32> to vector<8x256xf32>
    %127 = arith.select %5, %124, %123 : vector<8x256xi1>, vector<8x256xf32>
    %128 = arith.select %9, %126, %125 : vector<8x256xi1>, vector<8x256xf32>
    %129 = arith.select %13, %128, %127 : vector<8x256xi1>, vector<8x256xf32>
    %130 = arith.addf %129, %17 : vector<8x256xf32>
    %cst_46 = arith.constant 0.000000e+00 : f32
    %131 = vector.broadcast %cst_46 : f32 to vector<8x256xf32>
    %132 = arith.cmpf oge, %130, %131 : vector<8x256xf32>
    %133 = vector.broadcast %0 : f32 to vector<8x256xf32>
    %134 = arith.mulf %133, %130 : vector<8x256xf32>
    %135 = arith.select %132, %130, %134 : vector<8x256xi1>, vector<8x256xf32>
    %c0_47 = arith.constant 0 : index
    %c3 = arith.constant 3 : index
    %c0_48 = arith.constant 0 : index
    %c0_49 = arith.constant 0 : index
    %c0_50 = arith.constant 0 : index
    %136 = vector.load %arg7[%c0_47, %c3, %c0_48, %c0_49, %c0_50] : memref<1x8x2x8x256xf32, #tpu.memory_space<vmem>>, vector<1x1x1x8x256xf32>
    %137 = vector.shape_cast %136 : vector<1x1x1x8x256xf32> to vector<8x256xf32>
    %138 = vector.shape_cast %135 : vector<8x256xf32> to vector<1x1x1x8x256xf32>
    tpu.vector_store %arg7[%c0_47, %c3, %c0_48, %c0_49, %c0_50], %138 {strides = array<i32>} : memref<1x8x2x8x256xf32, #tpu.memory_space<vmem>>, vector<1x1x1x8x256xf32>,
    %139 = vector.extract_strided_slice %122 {offsets = [32, 0], sizes = [8, 256], strides = [1, 1]} : vector<64x256xf32> to vector<8x256xf32>
    %140 = vector.extract_strided_slice %122 {offsets = [40, 0], sizes = [8, 256], strides = [1, 1]} : vector<64x256xf32> to vector<8x256xf32>
    %141 = vector.extract_strided_slice %122 {offsets = [48, 0], sizes = [8, 256], strides = [1, 1]} : vector<64x256xf32> to vector<8x256xf32>
    %142 = vector.extract_strided_slice %122 {offsets = [56, 0], sizes = [8, 256], strides = [1, 1]} : vector<64x256xf32> to vector<8x256xf32>
    %143 = arith.select %5, %140, %139 : vector<8x256xi1>, vector<8x256xf32>
    %144 = arith.select %9, %142, %141 : vector<8x256xi1>, vector<8x256xf32>
    %145 = arith.select %13, %144, %143 : vector<8x256xi1>, vector<8x256xf32>
    %146 = arith.addf %145, %17 : vector<8x256xf32>
    %cst_51 = arith.constant 0.000000e+00 : f32
    %147 = vector.broadcast %cst_51 : f32 to vector<8x256xf32>
    %148 = arith.cmpf oge, %146, %147 : vector<8x256xf32>
    %149 = vector.broadcast %0 : f32 to vector<8x256xf32>
    %150 = arith.mulf %149, %146 : vector<8x256xf32>
    %151 = arith.select %148, %146, %150 : vector<8x256xi1>, vector<8x256xf32>
    %c0_52 = arith.constant 0 : index
    %c3_53 = arith.constant 3 : index
    %c1_54 = arith.constant 1 : index
    %c0_55 = arith.constant 0 : index
    %c0_56 = arith.constant 0 : index
    %152 = vector.load %arg7[%c0_52, %c3_53, %c1_54, %c0_55, %c0_56] : memref<1x8x2x8x256xf32, #tpu.memory_space<vmem>>, vector<1x1x1x8x256xf32>
    %153 = vector.shape_cast %152 : vector<1x1x1x8x256xf32> to vector<8x256xf32>
    %154 = vector.shape_cast %151 : vector<8x256xf32> to vector<1x1x1x8x256xf32>
    tpu.vector_store %arg7[%c0_52, %c3_53, %c1_54, %c0_55, %c0_56], %154 {strides = array<i32>} : memref<1x8x2x8x256xf32, #tpu.memory_space<vmem>>, vector<1x1x1x8x256xf32>,
    %155 = vector.extract_strided_slice %22 {offsets = [0, 1024], sizes = [64, 256], strides = [1, 1]} : vector<64x2048xf32> to vector<64x256xf32>
    %156 = vector.extract_strided_slice %155 {offsets = [0, 0], sizes = [8, 256], strides = [1, 1]} : vector<64x256xf32> to vector<8x256xf32>
    %157 = vector.extract_strided_slice %155 {offsets = [8, 0], sizes = [8, 256], strides = [1, 1]} : vector<64x256xf32> to vector<8x256xf32>
    %158 = vector.extract_strided_slice %155 {offsets = [16, 0], sizes = [8, 256], strides = [1, 1]} : vector<64x256xf32> to vector<8x256xf32>
    %159 = vector.extract_strided_slice %155 {offsets = [24, 0], sizes = [8, 256], strides = [1, 1]} : vector<64x256xf32> to vector<8x256xf32>
    %160 = arith.select %5, %157, %156 : vector<8x256xi1>, vector<8x256xf32>
    %161 = arith.select %9, %159, %158 : vector<8x256xi1>, vector<8x256xf32>
    %162 = arith.select %13, %161, %160 : vector<8x256xi1>, vector<8x256xf32>
    %163 = arith.addf %162, %17 : vector<8x256xf32>
    %cst_57 = arith.constant 0.000000e+00 : f32
    %164 = vector.broadcast %cst_57 : f32 to vector<8x256xf32>
    %165 = arith.cmpf oge, %163, %164 : vector<8x256xf32>
    %166 = vector.broadcast %0 : f32 to vector<8x256xf32>
    %167 = arith.mulf %166, %163 : vector<8x256xf32>
    %168 = arith.select %165, %163, %167 : vector<8x256xi1>, vector<8x256xf32>
    %c0_58 = arith.constant 0 : index
    %c4 = arith.constant 4 : index
    %c0_59 = arith.constant 0 : index
    %c0_60 = arith.constant 0 : index
    %c0_61 = arith.constant 0 : index
    %169 = vector.load %arg7[%c0_58, %c4, %c0_59, %c0_60, %c0_61] : memref<1x8x2x8x256xf32, #tpu.memory_space<vmem>>, vector<1x1x1x8x256xf32>
    %170 = vector.shape_cast %169 : vector<1x1x1x8x256xf32> to vector<8x256xf32>
    %171 = vector.shape_cast %168 : vector<8x256xf32> to vector<1x1x1x8x256xf32>
    tpu.vector_store %arg7[%c0_58, %c4, %c0_59, %c0_60, %c0_61], %171 {strides = array<i32>} : memref<1x8x2x8x256xf32, #tpu.memory_space<vmem>>, vector<1x1x1x8x256xf32>,
    %172 = vector.extract_strided_slice %155 {offsets = [32, 0], sizes = [8, 256], strides = [1, 1]} : vector<64x256xf32> to vector<8x256xf32>
    %173 = vector.extract_strided_slice %155 {offsets = [40, 0], sizes = [8, 256], strides = [1, 1]} : vector<64x256xf32> to vector<8x256xf32>
    %174 = vector.extract_strided_slice %155 {offsets = [48, 0], sizes = [8, 256], strides = [1, 1]} : vector<64x256xf32> to vector<8x256xf32>
    %175 = vector.extract_strided_slice %155 {offsets = [56, 0], sizes = [8, 256], strides = [1, 1]} : vector<64x256xf32> to vector<8x256xf32>
    %176 = arith.select %5, %173, %172 : vector<8x256xi1>, vector<8x256xf32>
    %177 = arith.select %9, %175, %174 : vector<8x256xi1>, vector<8x256xf32>
    %178 = arith.select %13, %177, %176 : vector<8x256xi1>, vector<8x256xf32>
    %179 = arith.addf %178, %17 : vector<8x256xf32>
    %cst_62 = arith.constant 0.000000e+00 : f32
    %180 = vector.broadcast %cst_62 : f32 to vector<8x256xf32>
    %181 = arith.cmpf oge, %179, %180 : vector<8x256xf32>
    %182 = vector.broadcast %0 : f32 to vector<8x256xf32>
    %183 = arith.mulf %182, %179 : vector<8x256xf32>
    %184 = arith.select %181, %179, %183 : vector<8x256xi1>, vector<8x256xf32>
    %c0_63 = arith.constant 0 : index
    %c4_64 = arith.constant 4 : index
    %c1_65 = arith.constant 1 : index
    %c0_66 = arith.constant 0 : index
    %c0_67 = arith.constant 0 : index
    %185 = vector.load %arg7[%c0_63, %c4_64, %c1_65, %c0_66, %c0_67] : memref<1x8x2x8x256xf32, #tpu.memory_space<vmem>>, vector<1x1x1x8x256xf32>
    %186 = vector.shape_cast %185 : vector<1x1x1x8x256xf32> to vector<8x256xf32>
    %187 = vector.shape_cast %184 : vector<8x256xf32> to vector<1x1x1x8x256xf32>
    tpu.vector_store %arg7[%c0_63, %c4_64, %c1_65, %c0_66, %c0_67], %187 {strides = array<i32>} : memref<1x8x2x8x256xf32, #tpu.memory_space<vmem>>, vector<1x1x1x8x256xf32>,
    %188 = vector.extract_strided_slice %22 {offsets = [0, 1280], sizes = [64, 256], strides = [1, 1]} : vector<64x2048xf32> to vector<64x256xf32>
    %189 = vector.extract_strided_slice %188 {offsets = [0, 0], sizes = [8, 256], strides = [1, 1]} : vector<64x256xf32> to vector<8x256xf32>
    %190 = vector.extract_strided_slice %188 {offsets = [8, 0], sizes = [8, 256], strides = [1, 1]} : vector<64x256xf32> to vector<8x256xf32>
    %191 = vector.extract_strided_slice %188 {offsets = [16, 0], sizes = [8, 256], strides = [1, 1]} : vector<64x256xf32> to vector<8x256xf32>
    %192 = vector.extract_strided_slice %188 {offsets = [24, 0], sizes = [8, 256], strides = [1, 1]} : vector<64x256xf32> to vector<8x256xf32>
    %193 = arith.select %5, %190, %189 : vector<8x256xi1>, vector<8x256xf32>
    %194 = arith.select %9, %192, %191 : vector<8x256xi1>, vector<8x256xf32>
    %195 = arith.select %13, %194, %193 : vector<8x256xi1>, vector<8x256xf32>
    %196 = arith.addf %195, %17 : vector<8x256xf32>
    %cst_68 = arith.constant 0.000000e+00 : f32
    %197 = vector.broadcast %cst_68 : f32 to vector<8x256xf32>
    %198 = arith.cmpf oge, %196, %197 : vector<8x256xf32>
    %199 = vector.broadcast %0 : f32 to vector<8x256xf32>
    %200 = arith.mulf %199, %196 : vector<8x256xf32>
    %201 = arith.select %198, %196, %200 : vector<8x256xi1>, vector<8x256xf32>
    %c0_69 = arith.constant 0 : index
    %c5 = arith.constant 5 : index
    %c0_70 = arith.constant 0 : index
    %c0_71 = arith.constant 0 : index
    %c0_72 = arith.constant 0 : index
    %202 = vector.load %arg7[%c0_69, %c5, %c0_70, %c0_71, %c0_72] : memref<1x8x2x8x256xf32, #tpu.memory_space<vmem>>, vector<1x1x1x8x256xf32>
    %203 = vector.shape_cast %202 : vector<1x1x1x8x256xf32> to vector<8x256xf32>
    %204 = vector.shape_cast %201 : vector<8x256xf32> to vector<1x1x1x8x256xf32>
    tpu.vector_store %arg7[%c0_69, %c5, %c0_70, %c0_71, %c0_72], %204 {strides = array<i32>} : memref<1x8x2x8x256xf32, #tpu.memory_space<vmem>>, vector<1x1x1x8x256xf32>,
    %205 = vector.extract_strided_slice %188 {offsets = [32, 0], sizes = [8, 256], strides = [1, 1]} : vector<64x256xf32> to vector<8x256xf32>
    %206 = vector.extract_strided_slice %188 {offsets = [40, 0], sizes = [8, 256], strides = [1, 1]} : vector<64x256xf32> to vector<8x256xf32>
    %207 = vector.extract_strided_slice %188 {offsets = [48, 0], sizes = [8, 256], strides = [1, 1]} : vector<64x256xf32> to vector<8x256xf32>
    %208 = vector.extract_strided_slice %188 {offsets = [56, 0], sizes = [8, 256], strides = [1, 1]} : vector<64x256xf32> to vector<8x256xf32>
    %209 = arith.select %5, %206, %205 : vector<8x256xi1>, vector<8x256xf32>
    %210 = arith.select %9, %208, %207 : vector<8x256xi1>, vector<8x256xf32>
    %211 = arith.select %13, %210, %209 : vector<8x256xi1>, vector<8x256xf32>
    %212 = arith.addf %211, %17 : vector<8x256xf32>
    %cst_73 = arith.constant 0.000000e+00 : f32
    %213 = vector.broadcast %cst_73 : f32 to vector<8x256xf32>
    %214 = arith.cmpf oge, %212, %213 : vector<8x256xf32>
    %215 = vector.broadcast %0 : f32 to vector<8x256xf32>
    %216 = arith.mulf %215, %212 : vector<8x256xf32>
    %217 = arith.select %214, %212, %216 : vector<8x256xi1>, vector<8x256xf32>
    %c0_74 = arith.constant 0 : index
    %c5_75 = arith.constant 5 : index
    %c1_76 = arith.constant 1 : index
    %c0_77 = arith.constant 0 : index
    %c0_78 = arith.constant 0 : index
    %218 = vector.load %arg7[%c0_74, %c5_75, %c1_76, %c0_77, %c0_78] : memref<1x8x2x8x256xf32, #tpu.memory_space<vmem>>, vector<1x1x1x8x256xf32>
    %219 = vector.shape_cast %218 : vector<1x1x1x8x256xf32> to vector<8x256xf32>
    %220 = vector.shape_cast %217 : vector<8x256xf32> to vector<1x1x1x8x256xf32>
    tpu.vector_store %arg7[%c0_74, %c5_75, %c1_76, %c0_77, %c0_78], %220 {strides = array<i32>} : memref<1x8x2x8x256xf32, #tpu.memory_space<vmem>>, vector<1x1x1x8x256xf32>,
    %221 = vector.extract_strided_slice %22 {offsets = [0, 1536], sizes = [64, 256], strides = [1, 1]} : vector<64x2048xf32> to vector<64x256xf32>
    %222 = vector.extract_strided_slice %221 {offsets = [0, 0], sizes = [8, 256], strides = [1, 1]} : vector<64x256xf32> to vector<8x256xf32>
    %223 = vector.extract_strided_slice %221 {offsets = [8, 0], sizes = [8, 256], strides = [1, 1]} : vector<64x256xf32> to vector<8x256xf32>
    %224 = vector.extract_strided_slice %221 {offsets = [16, 0], sizes = [8, 256], strides = [1, 1]} : vector<64x256xf32> to vector<8x256xf32>
    %225 = vector.extract_strided_slice %221 {offsets = [24, 0], sizes = [8, 256], strides = [1, 1]} : vector<64x256xf32> to vector<8x256xf32>
    %226 = arith.select %5, %223, %222 : vector<8x256xi1>, vector<8x256xf32>
    %227 = arith.select %9, %225, %224 : vector<8x256xi1>, vector<8x256xf32>
    %228 = arith.select %13, %227, %226 : vector<8x256xi1>, vector<8x256xf32>
    %229 = arith.addf %228, %17 : vector<8x256xf32>
    %cst_79 = arith.constant 0.000000e+00 : f32
    %230 = vector.broadcast %cst_79 : f32 to vector<8x256xf32>
    %231 = arith.cmpf oge, %229, %230 : vector<8x256xf32>
    %232 = vector.broadcast %0 : f32 to vector<8x256xf32>
    %233 = arith.mulf %232, %229 : vector<8x256xf32>
    %234 = arith.select %231, %229, %233 : vector<8x256xi1>, vector<8x256xf32>
    %c0_80 = arith.constant 0 : index
    %c6 = arith.constant 6 : index
    %c0_81 = arith.constant 0 : index
    %c0_82 = arith.constant 0 : index
    %c0_83 = arith.constant 0 : index
    %235 = vector.load %arg7[%c0_80, %c6, %c0_81, %c0_82, %c0_83] : memref<1x8x2x8x256xf32, #tpu.memory_space<vmem>>, vector<1x1x1x8x256xf32>
    %236 = vector.shape_cast %235 : vector<1x1x1x8x256xf32> to vector<8x256xf32>
    %237 = vector.shape_cast %234 : vector<8x256xf32> to vector<1x1x1x8x256xf32>
    tpu.vector_store %arg7[%c0_80, %c6, %c0_81, %c0_82, %c0_83], %237 {strides = array<i32>} : memref<1x8x2x8x256xf32, #tpu.memory_space<vmem>>, vector<1x1x1x8x256xf32>,
    %238 = vector.extract_strided_slice %221 {offsets = [32, 0], sizes = [8, 256], strides = [1, 1]} : vector<64x256xf32> to vector<8x256xf32>
    %239 = vector.extract_strided_slice %221 {offsets = [40, 0], sizes = [8, 256], strides = [1, 1]} : vector<64x256xf32> to vector<8x256xf32>
    %240 = vector.extract_strided_slice %221 {offsets = [48, 0], sizes = [8, 256], strides = [1, 1]} : vector<64x256xf32> to vector<8x256xf32>
    %241 = vector.extract_strided_slice %221 {offsets = [56, 0], sizes = [8, 256], strides = [1, 1]} : vector<64x256xf32> to vector<8x256xf32>
    %242 = arith.select %5, %239, %238 : vector<8x256xi1>, vector<8x256xf32>
    %243 = arith.select %9, %241, %240 : vector<8x256xi1>, vector<8x256xf32>
    %244 = arith.select %13, %243, %242 : vector<8x256xi1>, vector<8x256xf32>
    %245 = arith.addf %244, %17 : vector<8x256xf32>
    %cst_84 = arith.constant 0.000000e+00 : f32
    %246 = vector.broadcast %cst_84 : f32 to vector<8x256xf32>
    %247 = arith.cmpf oge, %245, %246 : vector<8x256xf32>
    %248 = vector.broadcast %0 : f32 to vector<8x256xf32>
    %249 = arith.mulf %248, %245 : vector<8x256xf32>
    %250 = arith.select %247, %245, %249 : vector<8x256xi1>, vector<8x256xf32>
    %c0_85 = arith.constant 0 : index
    %c6_86 = arith.constant 6 : index
    %c1_87 = arith.constant 1 : index
    %c0_88 = arith.constant 0 : index
    %c0_89 = arith.constant 0 : index
    %251 = vector.load %arg7[%c0_85, %c6_86, %c1_87, %c0_88, %c0_89] : memref<1x8x2x8x256xf32, #tpu.memory_space<vmem>>, vector<1x1x1x8x256xf32>
    %252 = vector.shape_cast %251 : vector<1x1x1x8x256xf32> to vector<8x256xf32>
    %253 = vector.shape_cast %250 : vector<8x256xf32> to vector<1x1x1x8x256xf32>
    tpu.vector_store %arg7[%c0_85, %c6_86, %c1_87, %c0_88, %c0_89], %253 {strides = array<i32>} : memref<1x8x2x8x256xf32, #tpu.memory_space<vmem>>, vector<1x1x1x8x256xf32>,
    %254 = vector.extract_strided_slice %22 {offsets = [0, 1792], sizes = [64, 256], strides = [1, 1]} : vector<64x2048xf32> to vector<64x256xf32>
    %255 = vector.extract_strided_slice %254 {offsets = [0, 0], sizes = [8, 256], strides = [1, 1]} : vector<64x256xf32> to vector<8x256xf32>
    %256 = vector.extract_strided_slice %254 {offsets = [8, 0], sizes = [8, 256], strides = [1, 1]} : vector<64x256xf32> to vector<8x256xf32>
    %257 = vector.extract_strided_slice %254 {offsets = [16, 0], sizes = [8, 256], strides = [1, 1]} : vector<64x256xf32> to vector<8x256xf32>
    %258 = vector.extract_strided_slice %254 {offsets = [24, 0], sizes = [8, 256], strides = [1, 1]} : vector<64x256xf32> to vector<8x256xf32>
    %259 = arith.select %5, %256, %255 : vector<8x256xi1>, vector<8x256xf32>
    %260 = arith.select %9, %258, %257 : vector<8x256xi1>, vector<8x256xf32>
    %261 = arith.select %13, %260, %259 : vector<8x256xi1>, vector<8x256xf32>
    %262 = arith.addf %261, %17 : vector<8x256xf32>
    %cst_90 = arith.constant 0.000000e+00 : f32
    %263 = vector.broadcast %cst_90 : f32 to vector<8x256xf32>
    %264 = arith.cmpf oge, %262, %263 : vector<8x256xf32>
    %265 = vector.broadcast %0 : f32 to vector<8x256xf32>
    %266 = arith.mulf %265, %262 : vector<8x256xf32>
    %267 = arith.select %264, %262, %266 : vector<8x256xi1>, vector<8x256xf32>
    %c0_91 = arith.constant 0 : index
    %c7 = arith.constant 7 : index
    %c0_92 = arith.constant 0 : index
    %c0_93 = arith.constant 0 : index
    %c0_94 = arith.constant 0 : index
    %268 = vector.load %arg7[%c0_91, %c7, %c0_92, %c0_93, %c0_94] : memref<1x8x2x8x256xf32, #tpu.memory_space<vmem>>, vector<1x1x1x8x256xf32>
    %269 = vector.shape_cast %268 : vector<1x1x1x8x256xf32> to vector<8x256xf32>
    %270 = vector.shape_cast %267 : vector<8x256xf32> to vector<1x1x1x8x256xf32>
    tpu.vector_store %arg7[%c0_91, %c7, %c0_92, %c0_93, %c0_94], %270 {strides = array<i32>} : memref<1x8x2x8x256xf32, #tpu.memory_space<vmem>>, vector<1x1x1x8x256xf32>,
    %271 = vector.extract_strided_slice %254 {offsets = [32, 0], sizes = [8, 256], strides = [1, 1]} : vector<64x256xf32> to vector<8x256xf32>
    %272 = vector.extract_strided_slice %254 {offsets = [40, 0], sizes = [8, 256], strides = [1, 1]} : vector<64x256xf32> to vector<8x256xf32>
    %273 = vector.extract_strided_slice %254 {offsets = [48, 0], sizes = [8, 256], strides = [1, 1]} : vector<64x256xf32> to vector<8x256xf32>
    %274 = vector.extract_strided_slice %254 {offsets = [56, 0], sizes = [8, 256], strides = [1, 1]} : vector<64x256xf32> to vector<8x256xf32>
    %275 = arith.select %5, %272, %271 : vector<8x256xi1>, vector<8x256xf32>
    %276 = arith.select %9, %274, %273 : vector<8x256xi1>, vector<8x256xf32>
    %277 = arith.select %13, %276, %275 : vector<8x256xi1>, vector<8x256xf32>
    %278 = arith.addf %277, %17 : vector<8x256xf32>
    %cst_95 = arith.constant 0.000000e+00 : f32
    %279 = vector.broadcast %cst_95 : f32 to vector<8x256xf32>
    %280 = arith.cmpf oge, %278, %279 : vector<8x256xf32>
    %281 = vector.broadcast %0 : f32 to vector<8x256xf32>
    %282 = arith.mulf %281, %278 : vector<8x256xf32>
    %283 = arith.select %280, %278, %282 : vector<8x256xi1>, vector<8x256xf32>
    %c0_96 = arith.constant 0 : index
    %c7_97 = arith.constant 7 : index
    %c1_98 = arith.constant 1 : index
    %c0_99 = arith.constant 0 : index
    %c0_100 = arith.constant 0 : index
    %284 = vector.load %arg7[%c0_96, %c7_97, %c1_98, %c0_99, %c0_100] : memref<1x8x2x8x256xf32, #tpu.memory_space<vmem>>, vector<1x1x1x8x256xf32>
    %285 = vector.shape_cast %284 : vector<1x1x1x8x256xf32> to vector<8x256xf32>
    %286 = vector.shape_cast %283 : vector<8x256xf32> to vector<1x1x1x8x256xf32>
    tpu.vector_store %arg7[%c0_96, %c7_97, %c1_98, %c0_99, %c0_100], %286 {strides = array<i32>} : memref<1x8x2x8x256xf32, #tpu.memory_space<vmem>>, vector<1x1x1x8x256xf32>,
    return
  }
  func.func @transform_0(%arg0: i32, %arg1: i32) -> i32 {
    %c0_i32 = arith.constant 0 : i32
    %c0_i32_0 = arith.constant 0 : i32
    return %c0_i32 : i32
  }
  func.func @transform_1(%arg0: i32, %arg1: i32) -> (i32, i32) {
    %c0_i32 = arith.constant 0 : i32
    %c0_i32_0 = arith.constant 0 : i32
    %c0_i32_1 = arith.constant 0 : i32
    return %c0_i32, %c0_i32_0 : i32, i32
  }
  func.func @transform_2(%arg0: i32, %arg1: i32) -> (i32, i32, i32) {
    %c0_i32 = arith.constant 0 : i32
    %c0_i32_0 = arith.constant 0 : i32
    %c0_i32_1 = arith.constant 0 : i32
    return %arg0, %c0_i32, %c0_i32_0 : i32, i32, i32
  }
  func.func @transform_3(%arg0: i32, %arg1: i32) -> (i32, i32, i32) {
    %c0_i32 = arith.constant 0 : i32
    %c0_i32_0 = arith.constant 0 : i32
    %c0_i32_1 = arith.constant 0 : i32
    return %arg0, %c0_i32, %c0_i32_0 : i32, i32, i32
  }
  func.func @transform_4(%arg0: i32, %arg1: i32) -> (i32, i32, i32, i32) {
    %c0_i32 = arith.constant 0 : i32
    %c0_i32_0 = arith.constant 0 : i32
    %c0_i32_1 = arith.constant 0 : i32
    return %arg0, %arg1, %c0_i32, %c0_i32_0 : i32, i32, i32, i32
  }
  func.func @transform_5(%arg0: i32, %arg1: i32) -> (i32, i32, i32, i32, i32) {
    %c0_i32 = arith.constant 0 : i32
    %c0_i32_0 = arith.constant 0 : i32
    %c0_i32_1 = arith.constant 0 : i32
    %c0_i32_2 = arith.constant 0 : i32
    return %arg0, %arg1, %c0_i32, %c0_i32_0, %c0_i32_1 : i32, i32, i32, i32, i32
  }
}

</mosaic_0001>

<llo_original>
// kernel: daub_forward.1
$region0: #{daub_forward.1}
  #allocation0 [shape = 'u32[]', space=smem, size = 0x4, offset = 0x4, fixed_abs, tag = 'smem constant byte address 0x4 - core index']
  #allocation1 [shape = 'u32[144,128]{1,0:T(1,128)}', space=vmem, size = 0x12000, scoped, tag = 'internal scratch']
  #allocation2 [shape = 'f32[1]{0:T(128)S(6)}', space=smem, size = 0x200, scoped, tag = 'scoped memory for daub_forward.1']
  %s0 = inlined_call_operand.<no memory space> [shape: f32[1], index: 0, kind: input, shape index: {}]
  %s1 = inlined_call_operand.vmem [shape: s32[1,256], index: 1, kind: input, shape index: {}]
  %s2 = inlined_call_operand.vmem [shape: bf16[2,64,4], index: 2, kind: input, shape index: {}]
  %s3 = inlined_call_operand.vmem [shape: f32[2,8,1], index: 3, kind: input, shape index: {}]
  %s4 = inlined_call_operand.vmem [shape: bf16[2,1,4,2048], index: 4, kind: input, shape index: {}]
  %s5 = inlined_call_operand.vmem [shape: f32[2,8,2,8,256], index: 5, kind: output, shape index: {}]
  %s6 = sld [smem:[#allocation0]]
  $region53: #{daub_forward.1} parent=0
    _
  %s8 = ssub.s32 1, %s6
  %s9 = scalar_select 0, %s8, %s6
  %10 = sst [smem:[#allocation2]] %s0
  loop: start=0, step=1, limit=4
  $region2: #{daub_forward.1} parent=0 // loop_pre_header
    _
  $region3: #{daub_forward.1} parent=0 // loop_header
    %s12 = sphi 0, %s16
    %p13 = scmp.ge.s32.totalorder %s12, 4
    %s19 = sphi 0, %s31
    %s20 = sphi 0, %s27
    %s21 = sphi 0, %s19
    %s22 = sphi 0, %s20
    %s23 = sphi 0, %s21
    %s24 = sphi 0, %s22
    %s32 = sphi 0, %s32
    %s34 = sphi 0, %s32
    %s35 = sphi 0, %s34
    %s49 = sphi 0, %s35
    %s53 = sphi 0, %s53
    %s55 = sphi 0, %s53
    %s56 = sphi 0, %s55
    %s70 = sphi 0, %s56
    %s76 = sphi 0, %s78
    %s79 = sphi 0, %s76
    %s80 = sphi 0, %s79
    %s96 = sphi 0, %s80
    %s102 = sphi 0, %s104
    %s105 = sphi 0, %s102
    %s106 = sphi 0, %s105
    %s122 = sphi 0, %s106
    %s130 = sphi 0, %s132
    %s133 = sphi 0, %s130
    %s134 = sphi 0, %s133
    %s150 = sphi 0, %s134
    %s158 = sphi 0, %s160
    %s161 = sphi 0, %s158
    %s162 = sphi 0, %s161
    %s178 = sphi 0, %s162
  $region4: #{daub_forward.1} parent=0 // loop_header_branch
    %15 = sbr.rel (%p13) target = $region8
  $region5: #{daub_forward.1} parent=0 // loop_body
    %s17 = ssub.s32 %s12, 1
    %s18 = ssub.s32 %s12, 2
    %s25 = sadd.s32 1, %s20
    %p26 = scmp.ge.s32.totalorder %s25, 1
    %s27 = scalar_select %p26, 0, %s25
    %s28 = sadd.s32 1, %s19
    %s29 = scalar_select %p26, %s28, %s19
    %p30 = scmp.ge.s32.totalorder %s29, 2
    %s31 = scalar_select %p30, 0, %s29
    %s33 = sadd.s32 %s32, 1
    %p36 = scmp.eq.s32.totalorder %s12, 1
    %p37 = scmp.ne.s32.totalorder %s32, %s34
    %p38 = scmp.eq.s32.totalorder %s12, 0
    %p39 = por %p37, %p38
    %p40 = scmp.ne.s32.totalorder %s32, %s34
    %p41 = scmp.eq.s32.totalorder %s17, 1
    %p42 = por %p40, %p41
    %p43 = scmp.ne.s32.totalorder %s34, %s35
    %p44 = scmp.eq.s32.totalorder %s17, 0
    %p45 = por %p43, %p44
    %p46 = scmp.ne.s32.totalorder %s34, %s35
    %p47 = scmp.eq.s32.totalorder %s18, 1
    %p48 = por %p46, %p47
    %p50 = scmp.ne.s32.totalorder %s35, %s49
    %p51 = scmp.eq.s32.totalorder %s18, 0
    %p52 = por %p50, %p51
    %s54 = sadd.s32 %s53, 1
    %p57 = scmp.eq.s32.totalorder %s12, 1
    %p58 = scmp.ne.s32.totalorder %s53, %s55
    %p59 = scmp.eq.s32.totalorder %s12, 0
    %p60 = por %p58, %p59
    %p61 = scmp.ne.s32.totalorder %s53, %s55
    %p62 = scmp.eq.s32.totalorder %s17, 1
    %p63 = por %p61, %p62
    %p64 = scmp.ne.s32.totalorder %s55, %s56
    %p65 = scmp.eq.s32.totalorder %s17, 0
    %p66 = por %p64, %p65
    %p67 = scmp.ne.s32.totalorder %s55, %s56
    %p68 = scmp.eq.s32.totalorder %s18, 1
    %p69 = por %p67, %p68
    %p71 = scmp.ne.s32.totalorder %s56, %s70
    %p72 = scmp.eq.s32.totalorder %s18, 0
    %p73 = por %p71, %p72
    %s74 = ssub.s32 %s19, %s31
    %p75 = scmp.eq.s32.totalorder %s74, 0
    %s77 = sadd.s32 %s76, 1
    %s78 = scalar_select %p75, %s76, %s77
    %p81 = pneg %p75
    %p82 = scmp.eq.s32.totalorder %s12, 1
    %p83 = por %p81, %p82
    %p84 = scmp.ne.s32.totalorder %s76, %s79
    %p85 = scmp.eq.s32.totalorder %s12, 0
    %p86 = por %p84, %p85
    %p87 = scmp.ne.s32.totalorder %s76, %s79
    %p88 = scmp.eq.s32.totalorder %s17, 1
    %p89 = por %p87, %p88
    %p90 = scmp.ne.s32.totalorder %s79, %s80
    %p91 = scmp.eq.s32.totalorder %s17, 0
    %p92 = por %p90, %p91
    %p93 = scmp.ne.s32.totalorder %s79, %s80
    %p94 = scmp.eq.s32.totalorder %s18, 1
    %p95 = por %p93, %p94
    %p97 = scmp.ne.s32.totalorder %s80, %s96
    %p98 = scmp.eq.s32.totalorder %s18, 0
    %p99 = por %p97, %p98
    %s100 = ssub.s32 %s19, %s31
    %p101 = scmp.eq.s32.totalorder %s100, 0
    %s103 = sadd.s32 %s102, 1
    %s104 = scalar_select %p101, %s102, %s103
    %p107 = pneg %p101
    %p108 = scmp.eq.s32.totalorder %s12, 1
    %p109 = por %p107, %p108
    %p110 = scmp.ne.s32.totalorder %s102, %s105
    %p111 = scmp.eq.s32.totalorder %s12, 0
    %p112 = por %p110, %p111
    %p113 = scmp.ne.s32.totalorder %s102, %s105
    %p114 = scmp.eq.s32.totalorder %s17, 1
    %p115 = por %p113, %p114
    %p116 = scmp.ne.s32.totalorder %s105, %s106
    %p117 = scmp.eq.s32.totalorder %s17, 0
    %p118 = por %p116, %p117
    %p119 = scmp.ne.s32.totalorder %s105, %s106
    %p120 = scmp.eq.s32.totalorder %s18, 1
    %p121 = por %p119, %p120
    %p123 = scmp.ne.s32.totalorder %s106, %s122
    %p124 = scmp.eq.s32.totalorder %s18, 0
    %p125 = por %p123, %p124
    %s126 = ssub.s32 %s19, %s31
    %s127 = ssub.s32 %s20, %s27
    %s128 = sor.u32 %s126, %s127
    %p129 = scmp.eq.s32.totalorder %s128, 0
    %s131 = sadd.s32 %s130, 1
    %s132 = scalar_select %p129, %s130, %s131
    %p135 = pneg %p129
    %p136 = scmp.eq.s32.totalorder %s12, 1
    %p137 = por %p135, %p136
    %p138 = scmp.ne.s32.totalorder %s130, %s133
    %p139 = scmp.eq.s32.totalorder %s12, 0
    %p140 = por %p138, %p139
    %p141 = scmp.ne.s32.totalorder %s130, %s133
    %p142 = scmp.eq.s32.totalorder %s17, 1
    %p143 = por %p141, %p142
    %p144 = scmp.ne.s32.totalorder %s133, %s134
    %p145 = scmp.eq.s32.totalorder %s17, 0
    %p146 = por %p144, %p145
    %p147 = scmp.ne.s32.totalorder %s133, %s134
    %p148 = scmp.eq.s32.totalorder %s18, 1
    %p149 = por %p147, %p148
    %p151 = scmp.ne.s32.totalorder %s134, %s150
    %p152 = scmp.eq.s32.totalorder %s18, 0
    %p153 = por %p151, %p152
    %s154 = ssub.s32 %s19, %s31
    %s155 = ssub.s32 %s20, %s27
    %s156 = sor.u32 %s154, %s155
    %p157 = scmp.eq.s32.totalorder %s156, 0
    %s159 = sadd.s32 %s158, 1
    %s160 = scalar_select %p157, %s158, %s159
    %p163 = pneg %p157
    %p164 = scmp.eq.s32.totalorder %s12, 1
    %p165 = por %p163, %p164
    %p166 = scmp.ne.s32.totalorder %s158, %s161
    %p167 = scmp.eq.s32.totalorder %s12, 0
    %p168 = por %p166, %p167
    %p169 = scmp.ne.s32.totalorder %s158, %s161
    %p170 = scmp.eq.s32.totalorder %s17, 1
    %p171 = por %p169, %p170
    %p172 = scmp.ne.s32.totalorder %s161, %s162
    %p173 = scmp.eq.s32.totalorder %s17, 0
    %p174 = por %p172, %p173
    %p175 = scmp.ne.s32.totalorder %s161, %s162
    %p176 = scmp.eq.s32.totalorder %s18, 1
    %p177 = por %p175, %p176
    %p179 = scmp.ne.s32.totalorder %s162, %s178
    %p180 = scmp.eq.s32.totalorder %s18, 0
    %p181 = por %p179, %p180
    %p182 = scmp.le.s32.totalorder 1, %s12
    %p183 = scmp.lt.s32.totalorder %s12, 3
    %p184 = pnand %p182, %p183
    %p185 = pneg %p184
    // Predicated region
    $region9: #{daub_forward.1} parent=5 // pred_check
      _
    $region10: #{daub_forward.1} parent=5 // pred_check_branch
      %187 = sbr.rel (%p184) target = $region12
    $region11: #{daub_forward.1} parent=5 // pred_region
      %s188 = ssub.s32 %s12, 1
      // Predicated region
      $region13: #{daub_forward.1} parent=11 // pred_check
        %p189 = pneg %p45
      $region14: #{daub_forward.1} parent=11 // pred_check_branch
        %191 = sbr.rel (%p189) target = $region16
      $region15: #{daub_forward.1} parent=11 // pred_region
        _
      $region16: #{daub_forward.1} parent=11 // pred_fallthru
        _
      // Predicated region
      $region17: #{daub_forward.1} parent=11 // pred_check
        %p192 = pneg %p66
      $region18: #{daub_forward.1} parent=11 // pred_check_branch
        %194 = sbr.rel (%p192) target = $region20
      $region19: #{daub_forward.1} parent=11 // pred_region
        _
      $region20: #{daub_forward.1} parent=11 // pred_fallthru
        _
    $region12: #{daub_forward.1} parent=5 // pred_fallthru
      _
    %p195 = scmp.lt.s32.totalorder %s12, 2
    // Predicated region
    $region21: #{daub_forward.1} parent=5 // pred_check
      %p196 = pneg %p195
    $region22: #{daub_forward.1} parent=5 // pred_check_branch
      %198 = sbr.rel (%p196) target = $region24
    $region23: #{daub_forward.1} parent=5 // pred_region
      // Predicated region
      $region25: #{daub_forward.1} parent=23 // pred_check
        %p199 = pneg %p86
      $region26: #{daub_forward.1} parent=23 // pred_check_branch
        %201 = sbr.rel (%p199) target = $region28
      $region27: #{daub_forward.1} parent=23 // pred_region
        %p202 = scmp.lt.s32.totalorder %s19, 1
        %s203 = scalar_select %p202, %s19, 1
        %s204 = smul.addr %s203, 8
        %s205 = smul.addr %s204, 4
        %s206 = scalar_lea.vmem %s2, %s205
      $region28: #{daub_forward.1} parent=23 // pred_fallthru
        _
      // Predicated region
      $region29: #{daub_forward.1} parent=23 // pred_check
        %p207 = pneg %p112
      $region30: #{daub_forward.1} parent=23 // pred_check_branch
        %209 = sbr.rel (%p207) target = $region32
      $region31: #{daub_forward.1} parent=23 // pred_region
        %p210 = scmp.lt.s32.totalorder %s19, 1
        %s211 = scalar_select %p210, %s19, 1
        %s212 = smul.addr %s211, 8
        %s213 = scalar_lea.vmem %s3, %s212
      $region32: #{daub_forward.1} parent=23 // pred_fallthru
        _
      // Predicated region
      $region33: #{daub_forward.1} parent=23 // pred_check
        %p214 = pneg %p140
      $region34: #{daub_forward.1} parent=23 // pred_check_branch
        %216 = sbr.rel (%p214) target = $region36
      $region35: #{daub_forward.1} parent=23 // pred_region
        %p217 = scmp.lt.s32.totalorder %s19, 1
        %s218 = scalar_select %p217, %s19, 1
        %p219 = scmp.lt.s32.totalorder %s20, 0
        %s220 = scalar_select %p219, %s20, 0
        %s221 = smul.addr %s220, 16
        %s222 = smul.addr %s218, 16
        %s223 = sadd.s32 %s221, %s222
        %s224 = smul.addr %s223, 2
        %s225 = scalar_lea.vmem %s4, %s224
      $region36: #{daub_forward.1} parent=23 // pred_fallthru
        _
    $region24: #{daub_forward.1} parent=5 // pred_fallthru
      _
    %p226 = scmp.le.s32.totalorder 1, %s12
    %p227 = scmp.lt.s32.totalorder %s12, 3
    %p228 = pnand %p226, %p227
    %p229 = pneg %p228
    // Predicated region
    $region37: #{daub_forward.1} parent=5 // pred_check
      _
    $region38: #{daub_forward.1} parent=5 // pred_check_branch
      %231 = sbr.rel (%p228) target = $region40
    $region39: #{daub_forward.1} parent=5 // pred_region
      %s232 = ssub.s32 %s12, 1
      %p233 = pneg %p45
      %p234 = pneg %p42
      %p235 = pneg %p66
      %p236 = pneg %p63
      %p237 = scmp.lt.s32.totalorder %s21, 1
      %s238 = scalar_select %p237, %s21, 1
      %s239 = smul.addr %s238, 8
      %s240 = smul.addr %s239, 4
      %s241 = scalar_lea.vmem %s2, %s240
      %p242 = pneg %p92
      %p243 = pneg %p89
      %p244 = scmp.lt.s32.totalorder %s21, 1
      %s245 = scalar_select %p244, %s21, 1
      %s246 = smul.addr %s245, 8
      %s247 = scalar_lea.vmem %s3, %s246
      %p248 = pneg %p118
      %p249 = pneg %p115
      %p250 = scmp.lt.s32.totalorder %s21, 1
      %s251 = scalar_select %p250, %s21, 1
      %p252 = scmp.lt.s32.totalorder %s22, 0
      %s253 = scalar_select %p252, %s22, 0
      %s254 = smul.addr %s253, 16
      %s255 = smul.addr %s251, 16
      %s256 = sadd.s32 %s254, %s255
      %s257 = smul.addr %s256, 2
      %s258 = scalar_lea.vmem %s4, %s257
      %p259 = pneg %p146
      %p260 = pneg %p143
      %p261 = pneg %p174
      %p262 = pneg %p171
      %s263 = smul.u32 8, %s22
      %p264 = scmp.lt.s32.totalorder %s21, 1
      %s265 = scalar_select %p264, %s21, 1
      %p266 = scmp.lt.s32.totalorder %s263, 7
      %s267 = scalar_select %p266, %s263, 7
      %s268 = smul.addr %s267, 4
      %s269 = smul.addr %s265, 32
      %s270 = sadd.s32 %s268, %s269
      %s271 = smul.addr %s270, 8
      %s272 = scalar_lea.vmem %s5, %s271
      %p273 = scmp.lt.s32.totalorder %s21, 1
      %s274 = scalar_select %p273, %s21, 1
      %s275 = smul.addr %s274, 8
      %s276 = smul.addr %s275, 4
      %s277 = scalar_lea.vmem %s2, %s276
      %p278 = scmp.lt.s32.totalorder %s21, 1
      %s279 = scalar_select %p278, %s21, 1
      %s280 = smul.addr %s279, 8
      %s281 = scalar_lea.vmem %s3, %s280
      %p282 = scmp.lt.s32.totalorder %s21, 1
      %s283 = scalar_select %p282, %s21, 1
      %p284 = scmp.lt.s32.totalorder %s22, 0
      %s285 = scalar_select %p284, %s22, 0
      %s286 = smul.addr %s285, 16
      %s287 = smul.addr %s283, 16
      %s288 = sadd.s32 %s286, %s287
      %s289 = smul.addr %s288, 2
      %s290 = scalar_lea.vmem %s4, %s289
      %s291 = smul.u32 8, %s22
      %p292 = scmp.lt.s32.totalorder %s21, 1
      %s293 = scalar_select %p292, %s21, 1
      %p294 = scmp.lt.s32.totalorder %s291, 7
      %s295 = scalar_select %p294, %s291, 7
      %s296 = smul.addr %s295, 4
      %s297 = smul.addr %s293, 32
      %s298 = sadd.s32 %s296, %s297
      %s299 = smul.addr %s298, 8
      %s300 = scalar_lea.vmem %s5, %s299
      %s301 = smul.u32 8, %s22
      %s303 = sld [smem:[#allocation2]]
      %v304 = vld [vmem:[%s1] sm:$0x3]
      %vm305 = vcmp.eq.s32.totalorder %v304, 1
      %v306 = vsel %vm305, 1, 0
      %v307 = vlaneseq
      %v308 = vshrl.u32 %v307, 7
      %v309 = vsub.s32 0, %v308
      %v310 = vrot.slane %v306, %v309
      %v311 = vlaneseq
      %v312 = vshrl.u32 %v311, 7
      %v313 = vsub.s32 1, %v312
      %v314 = vrot.slane %v306, %v313
      %vm315 = vcmp.eq.s32.totalorder %v310, 1
      %vm316 = vcmp.eq.s32.totalorder %v314, 1
      %vm317 = vcmp.eq.s32.totalorder %v304, 3
      %v318 = vsel %vm317, 1, 0
      %v319 = vlaneseq
      %v320 = vshrl.u32 %v319, 7
      %v321 = vsub.s32 0, %v320
      %v322 = vrot.slane %v318, %v321
      %v323 = vlaneseq
      %v324 = vshrl.u32 %v323, 7
      %v325 = vsub.s32 1, %v324
      %v326 = vrot.slane %v318, %v325
      %vm327 = vcmp.eq.s32.totalorder %v322, 1
      %vm328 = vcmp.eq.s32.totalorder %v326, 1
      %vm329 = vcmp.ge.s32.totalorder %v304, 2
      %v330 = vsel %vm329, 1, 0
      %v331 = vlaneseq
      %v332 = vshrl.u32 %v331, 7
      %v333 = vsub.s32 0, %v332
      %v334 = vrot.slane %v330, %v333
      %v335 = vlaneseq
      %v336 = vshrl.u32 %v335, 7
      %v337 = vsub.s32 1, %v336
      %v338 = vrot.slane %v330, %v337
      %vm339 = vcmp.eq.s32.totalorder %v334, 1
      %vm340 = vcmp.eq.s32.totalorder %v338, 1
      %v341 = vld [vmem:[%s281] sm:$0xff]
      %343 = vset.pattern.permute.xlu0 0
      %344 = vperm.xlu0 %343, %v341
      %v345 = vpop.permute.xlu0 %344
      %v347 = vld [vmem:[%s277] sm:$0xf]
      %v348 = vld [vmem:[%s277 + $0x4] sm:$0xf]
      %v349 = vld [vmem:[%s277 + $0x8] sm:$0xf]
      %v350 = vld [vmem:[%s277 + $0xc] sm:$0xf]
      %v351 = vld [vmem:[%s277 + $0x10] sm:$0xf]
      %v352 = vld [vmem:[%s277 + $0x14] sm:$0xf]
      %v353 = vld [vmem:[%s277 + $0x18] sm:$0xf]
      %v354 = vld [vmem:[%s277 + $0x1c] sm:$0xf]
      %v355 = vld [vmem:[%s290] sm:$0xff]
      %v356 = vld [vmem:[%s290 + $0x8] sm:$0xff]
      %v357 = vld [vmem:[%s290 + $0x10] sm:$0xff]
      %v358 = vld [vmem:[%s290 + $0x18] sm:$0xff]
      %v367 = vunpack.c.l.b16 %v347
      %v368 = vunpack.c.l.b16 %v348
      %v369 = vunpack.c.l.b16 %v349
      %v370 = vunpack.c.l.b16 %v350
      %v371 = vunpack.c.l.b16 %v351
      %v372 = vunpack.c.l.b16 %v352
      %v373 = vunpack.c.l.b16 %v353
      %v374 = vunpack.c.l.b16 %v354
      %v375 = vpack.c.b16 %v368, %v367
      %v376 = vpack.c.b16 %v370, %v369
      %v377 = vpack.c.b16 %v372, %v371
      %v378 = vpack.c.b16 %v374, %v373
      %v383 = vcombine.high %v355, %v355
      %v385 = vunpack.c.l.s4 1983009808
      %v386 = vunpack.c.0.s8 %v385
      %v387 = vlaneseq
      %v388 = vshrl.u32 %v387, 7
      %v389 = vsub.s32 %v386, %v388
      %v390 = vrot.slane %v355, %v389
      %v392 = vunpack.c.l.s4 1983009808
      %v393 = vunpack.c.0.s8 %v392
      %v394 = vlaneseq
      %v395 = vshrl.u32 %v394, 7
      %v396 = vsub.s32 %v393, %v395
      %v397 = vrot.slane %v383, %v396
      %v398 = vcombine.high %v390, %v390
      %v399 = vcombine.high %v397, %v397
      %v400 = vcombine.high %v356, %v356
      %v402 = vunpack.c.l.s4 1983009808
      %v403 = vunpack.c.0.s8 %v402
      %v404 = vlaneseq
      %v405 = vshrl.u32 %v404, 7
      %v406 = vsub.s32 %v403, %v405
      %v407 = vrot.slane %v356, %v406
      %v409 = vunpack.c.l.s4 1983009808
      %v410 = vunpack.c.0.s8 %v409
      %v411 = vlaneseq
      %v412 = vshrl.u32 %v411, 7
      %v413 = vsub.s32 %v410, %v412
      %v414 = vrot.slane %v400, %v413
      %v415 = vcombine.high %v407, %v407
      %v416 = vcombine.high %v414, %v414
      %v417 = vcombine.high %v357, %v357
      %v419 = vunpack.c.l.s4 1983009808
      %v420 = vunpack.c.0.s8 %v419
      %v421 = vlaneseq
      %v422 = vshrl.u32 %v421, 7
      %v423 = vsub.s32 %v420, %v422
      %v424 = vrot.slane %v357, %v423
      %v426 = vunpack.c.l.s4 1983009808
      %v427 = vunpack.c.0.s8 %v426
      %v428 = vlaneseq
      %v429 = vshrl.u32 %v428, 7
      %v430 = vsub.s32 %v427, %v429
      %v431 = vrot.slane %v417, %v430
      %v432 = vcombine.high %v424, %v424
      %v433 = vcombine.high %v431, %v431
      %v434 = vcombine.high %v358, %v358
      %v436 = vunpack.c.l.s4 1983009808
      %v437 = vunpack.c.0.s8 %v436
      %v438 = vlaneseq
      %v439 = vshrl.u32 %v438, 7
      %v440 = vsub.s32 %v437, %v439
      %v441 = vrot.slane %v358, %v440
      %v443 = vunpack.c.l.s4 1983009808
      %v444 = vunpack.c.0.s8 %v443
      %v445 = vlaneseq
      %v446 = vshrl.u32 %v445, 7
      %v447 = vsub.s32 %v444, %v446
      %v448 = vrot.slane %v434, %v447
      %v449 = vcombine.high %v441, %v441
      %v450 = vcombine.high %v448, %v448
      %vm451 = vcmask 31744
      %v453 = vsel %vm451, %v375, 0
      %v456 = vsel %vm451, %v376, 0
      %v459 = vsel %vm451, %v377, 0
      %v462 = vsel %vm451, %v378, 0
      %vm464 = vcmask 1041408
      %v466 = vsel %vm464, %v390, 0
      %v469 = vsel %vm464, %v398, 0
      %v472 = vsel %vm464, %v397, 0
      %v475 = vsel %vm464, %v399, 0
      %v478 = vsel %vm464, %v407, 0
      %v481 = vsel %vm464, %v415, 0
      %v484 = vsel %vm464, %v414, 0
      %v487 = vsel %vm464, %v416, 0
      %v490 = vsel %vm464, %v424, 0
      %v493 = vsel %vm464, %v432, 0
      %v496 = vsel %vm464, %v431, 0
      %v499 = vsel %vm464, %v433, 0
      %v502 = vsel %vm464, %v441, 0
      %v505 = vsel %vm464, %v449, 0
      %v508 = vsel %vm464, %v448, 0
      %v511 = vsel %vm464, %v450, 0
      %513 = vmatprep.subr.bf16.mxu0 %v469
      %514 = vmatpush1.bf16.msra.mxu0 %v466
      %515 = vmatprep.subr.bf16.mxu0 0
      %516 = vmatpush1.bf16.msra.mxu0 0
      %517 = vmatprep.subr.bf16.mxu0 0
      %518 = vmatpush1.bf16.msra.mxu0 0
      %519 = vmatprep.subr.bf16.mxu0 0
      %520 = vmatpush1.bf16.msra.mxu0 0
      %521 = vmatprep.subr.bf16.mxu0 0
      %522 = vmatpush1.bf16.msra.mxu0 0
      %523 = vmatprep.subr.bf16.mxu0 0
      %524 = vmatpush1.bf16.msra.mxu0 0
      %525 = vmatprep.subr.bf16.mxu0 0
      %526 = vmatpush1.bf16.msra.mxu0 0
      %527 = vmatprep.subr.bf16.mxu0 0
      %528 = vmatpush1.bf16.msra.mxu0 0
      %529 = vmatprep.subr.bf16.mxu0 0
      %530 = vmatpush1.bf16.msra.mxu0 0
      %531 = vmatprep.subr.bf16.mxu0 0
      %532 = vmatpush1.bf16.msra.mxu0 0
      %533 = vmatprep.subr.bf16.mxu0 0
      %534 = vmatpush1.bf16.msra.mxu0 0
      %535 = vmatprep.subr.bf16.mxu0 0
      %536 = vmatpush1.bf16.msra.mxu0 0
      %537 = vmatprep.subr.bf16.mxu0 0
      %538 = vmatpush1.bf16.msra.mxu0 0
      %539 = vmatprep.subr.bf16.mxu0 0
      %540 = vmatpush1.bf16.msra.mxu0 0
      %541 = vmatprep.subr.bf16.mxu0 0
      %542 = vmatpush1.bf16.msra.mxu0 0
      %543 = vmatprep.subr.bf16.mxu0 0
      %544 = vmatpush1.bf16.msra.mxu0 0
      %545 = vmatprep.mubr.bf16.mxu0 0
      %546 = vmatmul.mubr.bf16.gmra.mrb[0].mxu0 %v453
      %v547 = vpop.f32.mrb[0].mxu0
      %v548 = vadd.f32 0.0, %v547
      %v549 = vpop.f32.mrb[0].mxu0
      %v550 = vadd.f32 0.0, %v549
      %v551 = vpop.f32.mrb[0].mxu0
      %v552 = vadd.f32 0.0, %v551
      %v553 = vpop.f32.mrb[0].mxu0
      %v554 = vadd.f32 0.0, %v553
      %555 = vmatprep.mubr.bf16.mxu0 0
      %556 = vmatmul.mubr.bf16.gmra.mrb[0].mxu0 %v456
      %v557 = vpop.f32.mrb[0].mxu0
      %v558 = vadd.f32 0.0, %v557
      %v559 = vpop.f32.mrb[0].mxu0
      %v560 = vadd.f32 0.0, %v559
      %v561 = vpop.f32.mrb[0].mxu0
      %v562 = vadd.f32 0.0, %v561
      %v563 = vpop.f32.mrb[0].mxu0
      %v564 = vadd.f32 0.0, %v563
      %565 = vmatprep.mubr.bf16.mxu0 0
      %566 = vmatmul.mubr.bf16.gmra.mrb[0].mxu0 %v459
      %v567 = vpop.f32.mrb[0].mxu0
      %v568 = vadd.f32 0.0, %v567
      %v569 = vpop.f32.mrb[0].mxu0
      %v570 = vadd.f32 0.0, %v569
      %v571 = vpop.f32.mrb[0].mxu0
      %v572 = vadd.f32 0.0, %v571
      %v573 = vpop.f32.mrb[0].mxu0
      %v574 = vadd.f32 0.0, %v573
      %575 = vmatprep.mubr.bf16.mxu0 0
      %576 = vmatmul.mubr.bf16.gmra.mrb[0].mxu0 %v462
      %v577 = vpop.f32.mrb[0].mxu0
      %v578 = vadd.f32 0.0, %v577
      %v579 = vpop.f32.mrb[0].mxu0
      %v580 = vadd.f32 0.0, %v579
      %v581 = vpop.f32.mrb[0].mxu0
      %v582 = vadd.f32 0.0, %v581
      %v583 = vpop.f32.mrb[0].mxu0
      %v584 = vadd.f32 0.0, %v583
      %585 = vdwg.mxu0
      %586 = vmatprep.subr.bf16.mxu0 %v475
      %587 = vmatpush1.bf16.msra.mxu0 %v472
      %588 = vmatprep.subr.bf16.mxu0 0
      %589 = vmatpush1.bf16.msra.mxu0 0
      %590 = vmatprep.subr.bf16.mxu0 0
      %591 = vmatpush1.bf16.msra.mxu0 0
      %592 = vmatprep.subr.bf16.mxu0 0
      %593 = vmatpush1.bf16.msra.mxu0 0
      %594 = vmatprep.subr.bf16.mxu0 0
      %595 = vmatpush1.bf16.msra.mxu0 0
      %596 = vmatprep.subr.bf16.mxu0 0
      %597 = vmatpush1.bf16.msra.mxu0 0
      %598 = vmatprep.subr.bf16.mxu0 0
      %599 = vmatpush1.bf16.msra.mxu0 0
      %600 = vmatprep.subr.bf16.mxu0 0
      %601 = vmatpush1.bf16.msra.mxu0 0
      %602 = vmatprep.subr.bf16.mxu0 0
      %603 = vmatpush1.bf16.msra.mxu0 0
      %604 = vmatprep.subr.bf16.mxu0 0
      %605 = vmatpush1.bf16.msra.mxu0 0
      %606 = vmatprep.subr.bf16.mxu0 0
      %607 = vmatpush1.bf16.msra.mxu0 0
      %608 = vmatprep.subr.bf16.mxu0 0
      %609 = vmatpush1.bf16.msra.mxu0 0
      %610 = vmatprep.subr.bf16.mxu0 0
      %611 = vmatpush1.bf16.msra.mxu0 0
      %612 = vmatprep.subr.bf16.mxu0 0
      %613 = vmatpush1.bf16.msra.mxu0 0
      %614 = vmatprep.subr.bf16.mxu0 0
      %615 = vmatpush1.bf16.msra.mxu0 0
      %616 = vmatprep.subr.bf16.mxu0 0
      %617 = vmatpush1.bf16.msra.mxu0 0
      %618 = vmatprep.mubr.bf16.mxu0 0
      %619 = vmatmul.mubr.bf16.gmra.mrb[0].mxu0 %v453
      %v620 = vpop.f32.mrb[0].mxu0
      %v621 = vadd.f32 0.0, %v620
      %v622 = vpop.f32.mrb[0].mxu0
      %v623 = vadd.f32 0.0, %v622
      %v624 = vpop.f32.mrb[0].mxu0
      %v625 = vadd.f32 0.0, %v624
      %v626 = vpop.f32.mrb[0].mxu0
      %v627 = vadd.f32 0.0, %v626
      %628 = vmatprep.mubr.bf16.mxu0 0
      %629 = vmatmul.mubr.bf16.gmra.mrb[0].mxu0 %v456
      %v630 = vpop.f32.mrb[0].mxu0
      %v631 = vadd.f32 0.0, %v630
      %v632 = vpop.f32.mrb[0].mxu0
      %v633 = vadd.f32 0.0, %v632
      %v634 = vpop.f32.mrb[0].mxu0
      %v635 = vadd.f32 0.0, %v634
      %v636 = vpop.f32.mrb[0].mxu0
      %v637 = vadd.f32 0.0, %v636
      %638 = vmatprep.mubr.bf16.mxu0 0
      %639 = vmatmul.mubr.bf16.gmra.mrb[0].mxu0 %v459
      %v640 = vpop.f32.mrb[0].mxu0
      %v641 = vadd.f32 0.0, %v640
      %v642 = vpop.f32.mrb[0].mxu0
      %v643 = vadd.f32 0.0, %v642
      %v644 = vpop.f32.mrb[0].mxu0
      %v645 = vadd.f32 0.0, %v644
      %v646 = vpop.f32.mrb[0].mxu0
      %v647 = vadd.f32 0.0, %v646
      %648 = vmatprep.mubr.bf16.mxu0 0
      %649 = vmatmul.mubr.bf16.gmra.mrb[0].mxu0 %v462
      %v650 = vpop.f32.mrb[0].mxu0
      %v651 = vadd.f32 0.0, %v650
      %v652 = vpop.f32.mrb[0].mxu0
      %v653 = vadd.f32 0.0, %v652
      %v654 = vpop.f32.mrb[0].mxu0
      %v655 = vadd.f32 0.0, %v654
      %v656 = vpop.f32.mrb[0].mxu0
      %v657 = vadd.f32 0.0, %v656
      %658 = vdwg.mxu0
      %659 = vmatprep.subr.bf16.mxu0 %v481
      %660 = vmatpush1.bf16.msra.mxu0 %v478
      %661 = vmatprep.subr.bf16.mxu0 0
      %662 = vmatpush1.bf16.msra.mxu0 0
      %663 = vmatprep.subr.bf16.mxu0 0
      %664 = vmatpush1.bf16.msra.mxu0 0
      %665 = vmatprep.subr.bf16.mxu0 0
      %666 = vmatpush1.bf16.msra.mxu0 0
      %667 = vmatprep.subr.bf16.mxu0 0
      %668 = vmatpush1.bf16.msra.mxu0 0
      %669 = vmatprep.subr.bf16.mxu0 0
      %670 = vmatpush1.bf16.msra.mxu0 0
      %671 = vmatprep.subr.bf16.mxu0 0
      %672 = vmatpush1.bf16.msra.mxu0 0
      %673 = vmatprep.subr.bf16.mxu0 0
      %674 = vmatpush1.bf16.msra.mxu0 0
      %675 = vmatprep.subr.bf16.mxu0 0
      %676 = vmatpush1.bf16.msra.mxu0 0
      %677 = vmatprep.subr.bf16.mxu0 0
      %678 = vmatpush1.bf16.msra.mxu0 0
      %679 = vmatprep.subr.bf16.mxu0 0
      %680 = vmatpush1.bf16.msra.mxu0 0
      %681 = vmatprep.subr.bf16.mxu0 0
      %682 = vmatpush1.bf16.msra.mxu0 0
      %683 = vmatprep.subr.bf16.mxu0 0
      %684 = vmatpush1.bf16.msra.mxu0 0
      %685 = vmatprep.subr.bf16.mxu0 0
      %686 = vmatpush1.bf16.msra.mxu0 0
      %687 = vmatprep.subr.bf16.mxu0 0
      %688 = vmatpush1.bf16.msra.mxu0 0
      %689 = vmatprep.subr.bf16.mxu0 0
      %690 = vmatpush1.bf16.msra.mxu0 0
      %691 = vmatprep.mubr.bf16.mxu0 0
      %692 = vmatmul.mubr.bf16.gmra.mrb[0].mxu0 %v453
      %v693 = vpop.f32.mrb[0].mxu0
      %v694 = vadd.f32 0.0, %v693
      %v695 = vpop.f32.mrb[0].mxu0
      %v696 = vadd.f32 0.0, %v695
      %v697 = vpop.f32.mrb[0].mxu0
      %v698 = vadd.f32 0.0, %v697
      %v699 = vpop.f32.mrb[0].mxu0
      %v700 = vadd.f32 0.0, %v699
      %701 = vmatprep.mubr.bf16.mxu0 0
      %702 = vmatmul.mubr.bf16.gmra.mrb[0].mxu0 %v456
      %v703 = vpop.f32.mrb[0].mxu0
      %v704 = vadd.f32 0.0, %v703
      %v705 = vpop.f32.mrb[0].mxu0
      %v706 = vadd.f32 0.0, %v705
      %v707 = vpop.f32.mrb[0].mxu0
      %v708 = vadd.f32 0.0, %v707
      %v709 = vpop.f32.mrb[0].mxu0
      %v710 = vadd.f32 0.0, %v709
      %711 = vmatprep.mubr.bf16.mxu0 0
      %712 = vmatmul.mubr.bf16.gmra.mrb[0].mxu0 %v459
      %v713 = vpop.f32.mrb[0].mxu0
      %v714 = vadd.f32 0.0, %v713
      %v715 = vpop.f32.mrb[0].mxu0
      %v716 = vadd.f32 0.0, %v715
      %v717 = vpop.f32.mrb[0].mxu0
      %v718 = vadd.f32 0.0, %v717
      %v719 = vpop.f32.mrb[0].mxu0
      %v720 = vadd.f32 0.0, %v719
      %721 = vmatprep.mubr.bf16.mxu0 0
      %722 = vmatmul.mubr.bf16.gmra.mrb[0].mxu0 %v462
      %v723 = vpop.f32.mrb[0].mxu0
      %v724 = vadd.f32 0.0, %v723
      %v725 = vpop.f32.mrb[0].mxu0
      %v726 = vadd.f32 0.0, %v725
      %v727 = vpop.f32.mrb[0].mxu0
      %v728 = vadd.f32 0.0, %v727
      %v729 = vpop.f32.mrb[0].mxu0
      %v730 = vadd.f32 0.0, %v729
      %731 = vdwg.mxu0
      %732 = vmatprep.subr.bf16.mxu0 %v487
      %733 = vmatpush1.bf16.msra.mxu0 %v484
      %734 = vmatprep.subr.bf16.mxu0 0
      %735 = vmatpush1.bf16.msra.mxu0 0
      %736 = vmatprep.subr.bf16.mxu0 0
      %737 = vmatpush1.bf16.msra.mxu0 0
      %738 = vmatprep.subr.bf16.mxu0 0
      %739 = vmatpush1.bf16.msra.mxu0 0
      %740 = vmatprep.subr.bf16.mxu0 0
      %741 = vmatpush1.bf16.msra.mxu0 0
      %742 = vmatprep.subr.bf16.mxu0 0
      %743 = vmatpush1.bf16.msra.mxu0 0
      %744 = vmatprep.subr.bf16.mxu0 0
      %745 = vmatpush1.bf16.msra.mxu0 0
      %746 = vmatprep.subr.bf16.mxu0 0
      %747 = vmatpush1.bf16.msra.mxu0 0
      %748 = vmatprep.subr.bf16.mxu0 0
      %749 = vmatpush1.bf16.msra.mxu0 0
      %750 = vmatprep.subr.bf16.mxu0 0
      %751 = vmatpush1.bf16.msra.mxu0 0
      %752 = vmatprep.subr.bf16.mxu0 0
      %753 = vmatpush1.bf16.msra.mxu0 0
      %754 = vmatprep.subr.bf16.mxu0 0
      %755 = vmatpush1.bf16.msra.mxu0 0
      %756 = vmatprep.subr.bf16.mxu0 0
      %757 = vmatpush1.bf16.msra.mxu0 0
      %758 = vmatprep.subr.bf16.mxu0 0
      %759 = vmatpush1.bf16.msra.mxu0 0
      %760 = vmatprep.subr.bf16.mxu0 0
      %761 = vmatpush1.bf16.msra.mxu0 0
      %762 = vmatprep.subr.bf16.mxu0 0
      %763 = vmatpush1.bf16.msra.mxu0 0
      %764 = vmatprep.mubr.bf16.mxu0 0
      %765 = vmatmul.mubr.bf16.gmra.mrb[0].mxu0 %v453
      %v766 = vpop.f32.mrb[0].mxu0
      %v767 = vadd.f32 0.0, %v766
      %v768 = vpop.f32.mrb[0].mxu0
      %v769 = vadd.f32 0.0, %v768
      %v770 = vpop.f32.mrb[0].mxu0
      %v771 = vadd.f32 0.0, %v770
      %v772 = vpop.f32.mrb[0].mxu0
      %v773 = vadd.f32 0.0, %v772
      %774 = vmatprep.mubr.bf16.mxu0 0
      %775 = vmatmul.mubr.bf16.gmra.mrb[0].mxu0 %v456
      %v776 = vpop.f32.mrb[0].mxu0
      %v777 = vadd.f32 0.0, %v776
      %v778 = vpop.f32.mrb[0].mxu0
      %v779 = vadd.f32 0.0, %v778
      %v780 = vpop.f32.mrb[0].mxu0
      %v781 = vadd.f32 0.0, %v780
      %v782 = vpop.f32.mrb[0].mxu0
      %v783 = vadd.f32 0.0, %v782
      %784 = vmatprep.mubr.bf16.mxu0 0
      %785 = vmatmul.mubr.bf16.gmra.mrb[0].mxu0 %v459
      %v786 = vpop.f32.mrb[0].mxu0
      %v787 = vadd.f32 0.0, %v786
      %v788 = vpop.f32.mrb[0].mxu0
      %v789 = vadd.f32 0.0, %v788
      %v790 = vpop.f32.mrb[0].mxu0
      %v791 = vadd.f32 0.0, %v790
      %v792 = vpop.f32.mrb[0].mxu0
      %v793 = vadd.f32 0.0, %v792
      %794 = vmatprep.mubr.bf16.mxu0 0
      %795 = vmatmul.mubr.bf16.gmra.mrb[0].mxu0 %v462
      %v796 = vpop.f32.mrb[0].mxu0
      %v797 = vadd.f32 0.0, %v796
      %v798 = vpop.f32.mrb[0].mxu0
      %v799 = vadd.f32 0.0, %v798
      %v800 = vpop.f32.mrb[0].mxu0
      %v801 = vadd.f32 0.0, %v800
      %v802 = vpop.f32.mrb[0].mxu0
      %v803 = vadd.f32 0.0, %v802
      %804 = vdwg.mxu0
      %805 = vmatprep.subr.bf16.mxu0 %v493
      %806 = vmatpush1.bf16.msra.mxu0 %v490
      %807 = vmatprep.subr.bf16.mxu0 0
      %808 = vmatpush1.bf16.msra.mxu0 0
      %809 = vmatprep.subr.bf16.mxu0 0
      %810 = vmatpush1.bf16.msra.mxu0 0
      %811 = vmatprep.subr.bf16.mxu0 0
      %812 = vmatpush1.bf16.msra.mxu0 0
      %813 = vmatprep.subr.bf16.mxu0 0
      %814 = vmatpush1.bf16.msra.mxu0 0
      %815 = vmatprep.subr.bf16.mxu0 0
      %816 = vmatpush1.bf16.msra.mxu0 0
      %817 = vmatprep.subr.bf16.mxu0 0
      %818 = vmatpush1.bf16.msra.mxu0 0
      %819 = vmatprep.subr.bf16.mxu0 0
      %820 = vmatpush1.bf16.msra.mxu0 0
      %821 = vmatprep.subr.bf16.mxu0 0
      %822 = vmatpush1.bf16.msra.mxu0 0
      %823 = vmatprep.subr.bf16.mxu0 0
      %824 = vmatpush1.bf16.msra.mxu0 0
      %825 = vmatprep.subr.bf16.mxu0 0
      %826 = vmatpush1.bf16.msra.mxu0 0
      %827 = vmatprep.subr.bf16.mxu0 0
      %828 = vmatpush1.bf16.msra.mxu0 0
      %829 = vmatprep.subr.bf16.mxu0 0
      %830 = vmatpush1.bf16.msra.mxu0 0
      %831 = vmatprep.subr.bf16.mxu0 0
      %832 = vmatpush1.bf16.msra.mxu0 0
      %833 = vmatprep.subr.bf16.mxu0 0
      %834 = vmatpush1.bf16.msra.mxu0 0
      %835 = vmatprep.subr.bf16.mxu0 0
      %836 = vmatpush1.bf16.msra.mxu0 0
      %837 = vmatprep.mubr.bf16.mxu0 0
      %838 = vmatmul.mubr.bf16.gmra.mrb[0].mxu0 %v453
      %v839 = vpop.f32.mrb[0].mxu0
      %v840 = vadd.f32 0.0, %v839
      %v841 = vpop.f32.mrb[0].mxu0
      %v842 = vadd.f32 0.0, %v841
      %v843 = vpop.f32.mrb[0].mxu0
      %v844 = vadd.f32 0.0, %v843
      %v845 = vpop.f32.mrb[0].mxu0
      %v846 = vadd.f32 0.0, %v845
      %847 = vmatprep.mubr.bf16.mxu0 0
      %848 = vmatmul.mubr.bf16.gmra.mrb[0].mxu0 %v456
      %v849 = vpop.f32.mrb[0].mxu0
      %v850 = vadd.f32 0.0, %v849
      %v851 = vpop.f32.mrb[0].mxu0
      %v852 = vadd.f32 0.0, %v851
      %v853 = vpop.f32.mrb[0].mxu0
      %v854 = vadd.f32 0.0, %v853
      %v855 = vpop.f32.mrb[0].mxu0
      %v856 = vadd.f32 0.0, %v855
      %857 = vmatprep.mubr.bf16.mxu0 0
      %858 = vmatmul.mubr.bf16.gmra.mrb[0].mxu0 %v459
      %v859 = vpop.f32.mrb[0].mxu0
      %v860 = vadd.f32 0.0, %v859
      %v861 = vpop.f32.mrb[0].mxu0
      %v862 = vadd.f32 0.0, %v861
      %v863 = vpop.f32.mrb[0].mxu0
      %v864 = vadd.f32 0.0, %v863
      %v865 = vpop.f32.mrb[0].mxu0
      %v866 = vadd.f32 0.0, %v865
      %867 = vmatprep.mubr.bf16.mxu0 0
      %868 = vmatmul.mubr.bf16.gmra.mrb[0].mxu0 %v462
      %v869 = vpop.f32.mrb[0].mxu0
      %v870 = vadd.f32 0.0, %v869
      %v871 = vpop.f32.mrb[0].mxu0
      %v872 = vadd.f32 0.0, %v871
      %v873 = vpop.f32.mrb[0].mxu0
      %v874 = vadd.f32 0.0, %v873
      %v875 = vpop.f32.mrb[0].mxu0
      %v876 = vadd.f32 0.0, %v875
      %877 = vdwg.mxu0
      %878 = vmatprep.subr.bf16.mxu0 %v499
      %879 = vmatpush1.bf16.msra.mxu0 %v496
      %880 = vmatprep.subr.bf16.mxu0 0
      %881 = vmatpush1.bf16.msra.mxu0 0
      %882 = vmatprep.subr.bf16.mxu0 0
      %883 = vmatpush1.bf16.msra.mxu0 0
      %884 = vmatprep.subr.bf16.mxu0 0
      %885 = vmatpush1.bf16.msra.mxu0 0
      %886 = vmatprep.subr.bf16.mxu0 0
      %887 = vmatpush1.bf16.msra.mxu0 0
      %888 = vmatprep.subr.bf16.mxu0 0
      %889 = vmatpush1.bf16.msra.mxu0 0
      %890 = vmatprep.subr.bf16.mxu0 0
      %891 = vmatpush1.bf16.msra.mxu0 0
      %892 = vmatprep.subr.bf16.mxu0 0
      %893 = vmatpush1.bf16.msra.mxu0 0
      %894 = vmatprep.subr.bf16.mxu0 0
      %895 = vmatpush1.bf16.msra.mxu0 0
      %896 = vmatprep.subr.bf16.mxu0 0
      %897 = vmatpush1.bf16.msra.mxu0 0
      %898 = vmatprep.subr.bf16.mxu0 0
      %899 = vmatpush1.bf16.msra.mxu0 0
      %900 = vmatprep.subr.bf16.mxu0 0
      %901 = vmatpush1.bf16.msra.mxu0 0
      %902 = vmatprep.subr.bf16.mxu0 0
      %903 = vmatpush1.bf16.msra.mxu0 0
      %904 = vmatprep.subr.bf16.mxu0 0
      %905 = vmatpush1.bf16.msra.mxu0 0
      %906 = vmatprep.subr.bf16.mxu0 0
      %907 = vmatpush1.bf16.msra.mxu0 0
      %908 = vmatprep.subr.bf16.mxu0 0
      %909 = vmatpush1.bf16.msra.mxu0 0
      %910 = vmatprep.mubr.bf16.mxu0 0
      %911 = vmatmul.mubr.bf16.gmra.mrb[0].mxu0 %v453
      %v912 = vpop.f32.mrb[0].mxu0
      %v913 = vadd.f32 0.0, %v912
      %v914 = vpop.f32.mrb[0].mxu0
      %v915 = vadd.f32 0.0, %v914
      %v916 = vpop.f32.mrb[0].mxu0
      %v917 = vadd.f32 0.0, %v916
      %v918 = vpop.f32.mrb[0].mxu0
      %v919 = vadd.f32 0.0, %v918
      %920 = vmatprep.mubr.bf16.mxu0 0
      %921 = vmatmul.mubr.bf16.gmra.mrb[0].mxu0 %v456
      %v922 = vpop.f32.mrb[0].mxu0
      %v923 = vadd.f32 0.0, %v922
      %v924 = vpop.f32.mrb[0].mxu0
      %v925 = vadd.f32 0.0, %v924
      %v926 = vpop.f32.mrb[0].mxu0
      %v927 = vadd.f32 0.0, %v926
      %v928 = vpop.f32.mrb[0].mxu0
      %v929 = vadd.f32 0.0, %v928
      %930 = vmatprep.mubr.bf16.mxu0 0
      %931 = vmatmul.mubr.bf16.gmra.mrb[0].mxu0 %v459
      %v932 = vpop.f32.mrb[0].mxu0
      %v933 = vadd.f32 0.0, %v932
      %v934 = vpop.f32.mrb[0].mxu0
      %v935 = vadd.f32 0.0, %v934
      %v936 = vpop.f32.mrb[0].mxu0
      %v937 = vadd.f32 0.0, %v936
      %v938 = vpop.f32.mrb[0].mxu0
      %v939 = vadd.f32 0.0, %v938
      %940 = vmatprep.mubr.bf16.mxu0 0
      %941 = vmatmul.mubr.bf16.gmra.mrb[0].mxu0 %v462
      %v942 = vpop.f32.mrb[0].mxu0
      %v943 = vadd.f32 0.0, %v942
      %v944 = vpop.f32.mrb[0].mxu0
      %v945 = vadd.f32 0.0, %v944
      %v946 = vpop.f32.mrb[0].mxu0
      %v947 = vadd.f32 0.0, %v946
      %v948 = vpop.f32.mrb[0].mxu0
      %v949 = vadd.f32 0.0, %v948
      %950 = vdwg.mxu0
      %951 = vmatprep.subr.bf16.mxu0 %v505
      %952 = vmatpush1.bf16.msra.mxu0 %v502
      %953 = vmatprep.subr.bf16.mxu0 0
      %954 = vmatpush1.bf16.msra.mxu0 0
      %955 = vmatprep.subr.bf16.mxu0 0
      %956 = vmatpush1.bf16.msra.mxu0 0
      %957 = vmatprep.subr.bf16.mxu0 0
      %958 = vmatpush1.bf16.msra.mxu0 0
      %959 = vmatprep.subr.bf16.mxu0 0
      %960 = vmatpush1.bf16.msra.mxu0 0
      %961 = vmatprep.subr.bf16.mxu0 0
      %962 = vmatpush1.bf16.msra.mxu0 0
      %963 = vmatprep.subr.bf16.mxu0 0
      %964 = vmatpush1.bf16.msra.mxu0 0
      %965 = vmatprep.subr.bf16.mxu0 0
      %966 = vmatpush1.bf16.msra.mxu0 0
      %967 = vmatprep.subr.bf16.mxu0 0
      %968 = vmatpush1.bf16.msra.mxu0 0
      %969 = vmatprep.subr.bf16.mxu0 0
      %970 = vmatpush1.bf16.msra.mxu0 0
      %971 = vmatprep.subr.bf16.mxu0 0
      %972 = vmatpush1.bf16.msra.mxu0 0
      %973 = vmatprep.subr.bf16.mxu0 0
      %974 = vmatpush1.bf16.msra.mxu0 0
      %975 = vmatprep.subr.bf16.mxu0 0
      %976 = vmatpush1.bf16.msra.mxu0 0
      %977 = vmatprep.subr.bf16.mxu0 0
      %978 = vmatpush1.bf16.msra.mxu0 0
      %979 = vmatprep.subr.bf16.mxu0 0
      %980 = vmatpush1.bf16.msra.mxu0 0
      %981 = vmatprep.subr.bf16.mxu0 0
      %982 = vmatpush1.bf16.msra.mxu0 0
      %983 = vmatprep.mubr.bf16.mxu0 0
      %984 = vmatmul.mubr.bf16.gmra.mrb[0].mxu0 %v453
      %v985 = vpop.f32.mrb[0].mxu0
      %v986 = vadd.f32 0.0, %v985
      %v987 = vpop.f32.mrb[0].mxu0
      %v988 = vadd.f32 0.0, %v987
      %v989 = vpop.f32.mrb[0].mxu0
      %v990 = vadd.f32 0.0, %v989
      %v991 = vpop.f32.mrb[0].mxu0
      %v992 = vadd.f32 0.0, %v991
      %993 = vmatprep.mubr.bf16.mxu0 0
      %994 = vmatmul.mubr.bf16.gmra.mrb[0].mxu0 %v456
      %v995 = vpop.f32.mrb[0].mxu0
      %v996 = vadd.f32 0.0, %v995
      %v997 = vpop.f32.mrb[0].mxu0
      %v998 = vadd.f32 0.0, %v997
      %v999 = vpop.f32.mrb[0].mxu0
      %v1000 = vadd.f32 0.0, %v999
      %v1001 = vpop.f32.mrb[0].mxu0
      %v1002 = vadd.f32 0.0, %v1001
      %1003 = vmatprep.mubr.bf16.mxu0 0
      %1004 = vmatmul.mubr.bf16.gmra.mrb[0].mxu0 %v459
      %v1005 = vpop.f32.mrb[0].mxu0
      %v1006 = vadd.f32 0.0, %v1005
      %v1007 = vpop.f32.mrb[0].mxu0
      %v1008 = vadd.f32 0.0, %v1007
      %v1009 = vpop.f32.mrb[0].mxu0
      %v1010 = vadd.f32 0.0, %v1009
      %v1011 = vpop.f32.mrb[0].mxu0
      %v1012 = vadd.f32 0.0, %v1011
      %1013 = vmatprep.mubr.bf16.mxu0 0
      %1014 = vmatmul.mubr.bf16.gmra.mrb[0].mxu0 %v462
      %v1015 = vpop.f32.mrb[0].mxu0
      %v1016 = vadd.f32 0.0, %v1015
      %v1017 = vpop.f32.mrb[0].mxu0
      %v1018 = vadd.f32 0.0, %v1017
      %v1019 = vpop.f32.mrb[0].mxu0
      %v1020 = vadd.f32 0.0, %v1019
      %v1021 = vpop.f32.mrb[0].mxu0
      %v1022 = vadd.f32 0.0, %v1021
      %1023 = vdwg.mxu0
      %1024 = vmatprep.subr.bf16.mxu0 %v511
      %1025 = vmatpush1.bf16.msra.mxu0 %v508
      %1026 = vmatprep.subr.bf16.mxu0 0
      %1027 = vmatpush1.bf16.msra.mxu0 0
      %1028 = vmatprep.subr.bf16.mxu0 0
      %1029 = vmatpush1.bf16.msra.mxu0 0
      %1030 = vmatprep.subr.bf16.mxu0 0
      %1031 = vmatpush1.bf16.msra.mxu0 0
      %1032 = vmatprep.subr.bf16.mxu0 0
      %1033 = vmatpush1.bf16.msra.mxu0 0
      %1034 = vmatprep.subr.bf16.mxu0 0
      %1035 = vmatpush1.bf16.msra.mxu0 0
      %1036 = vmatprep.subr.bf16.mxu0 0
      %1037 = vmatpush1.bf16.msra.mxu0 0
      %1038 = vmatprep.subr.bf16.mxu0 0
      %1039 = vmatpush1.bf16.msra.mxu0 0
      %1040 = vmatprep.subr.bf16.mxu0 0
      %1041 = vmatpush1.bf16.msra.mxu0 0
      %1042 = vmatprep.subr.bf16.mxu0 0
      %1043 = vmatpush1.bf16.msra.mxu0 0
      %1044 = vmatprep.subr.bf16.mxu0 0
      %1045 = vmatpush1.bf16.msra.mxu0 0
      %1046 = vmatprep.subr.bf16.mxu0 0
      %1047 = vmatpush1.bf16.msra.mxu0 0
      %1048 = vmatprep.subr.bf16.mxu0 0
      %1049 = vmatpush1.bf16.msra.mxu0 0
      %1050 = vmatprep.subr.bf16.mxu0 0
      %1051 = vmatpush1.bf16.msra.mxu0 0
      %1052 = vmatprep.subr.bf16.mxu0 0
      %1053 = vmatpush1.bf16.msra.mxu0 0
      %1054 = vmatprep.subr.bf16.mxu0 0
      %1055 = vmatpush1.bf16.msra.mxu0 0
      %1056 = vmatprep.mubr.bf16.mxu0 0
      %1057 = vmatmul.mubr.bf16.gmra.mrb[0].mxu0 %v453
      %v1058 = vpop.f32.mrb[0].mxu0
      %v1059 = vadd.f32 0.0, %v1058
      %v1060 = vpop.f32.mrb[0].mxu0
      %v1061 = vadd.f32 0.0, %v1060
      %v1062 = vpop.f32.mrb[0].mxu0
      %v1063 = vadd.f32 0.0, %v1062
      %v1064 = vpop.f32.mrb[0].mxu0
      %v1065 = vadd.f32 0.0, %v1064
      %1066 = vmatprep.mubr.bf16.mxu0 0
      %1067 = vmatmul.mubr.bf16.gmra.mrb[0].mxu0 %v456
      %v1068 = vpop.f32.mrb[0].mxu0
      %v1069 = vadd.f32 0.0, %v1068
      %v1070 = vpop.f32.mrb[0].mxu0
      %v1071 = vadd.f32 0.0, %v1070
      %v1072 = vpop.f32.mrb[0].mxu0
      %v1073 = vadd.f32 0.0, %v1072
      %v1074 = vpop.f32.mrb[0].mxu0
      %v1075 = vadd.f32 0.0, %v1074
      %1076 = vmatprep.mubr.bf16.mxu0 0
      %1077 = vmatmul.mubr.bf16.gmra.mrb[0].mxu0 %v459
      %v1078 = vpop.f32.mrb[0].mxu0
      %v1079 = vadd.f32 0.0, %v1078
      %v1080 = vpop.f32.mrb[0].mxu0
      %v1081 = vadd.f32 0.0, %v1080
      %v1082 = vpop.f32.mrb[0].mxu0
      %v1083 = vadd.f32 0.0, %v1082
      %v1084 = vpop.f32.mrb[0].mxu0
      %v1085 = vadd.f32 0.0, %v1084
      %1086 = vmatprep.mubr.bf16.mxu0 0
      %1087 = vmatmul.mubr.bf16.gmra.mrb[0].mxu0 %v462
      %v1088 = vpop.f32.mrb[0].mxu0
      %v1089 = vadd.f32 0.0, %v1088
      %v1090 = vpop.f32.mrb[0].mxu0
      %v1091 = vadd.f32 0.0, %v1090
      %v1092 = vpop.f32.mrb[0].mxu0
      %v1093 = vadd.f32 0.0, %v1092
      %v1094 = vpop.f32.mrb[0].mxu0
      %v1095 = vadd.f32 0.0, %v1094
      %1096 = vdwg.mxu0
      %v1097 = vsel %vm315, %v552, %v548
      %v1098 = vsel %vm316, %v554, %v550
      %v1099 = vsel %vm327, %v562, %v558
      %v1100 = vsel %vm328, %v564, %v560
      %v1101 = vsel %vm339, %v1099, %v1097
      %v1102 = vsel %vm340, %v1100, %v1098
      %v1103 = vadd.f32 %v1101, %v345
      %v1104 = vadd.f32 %v1102, %v345
      %vm1105 = vcmp.ge.f32.partialorder %v1103, 0.0
      %vm1106 = vcmp.ge.f32.partialorder %v1104, 0.0
      %v1107 = vstv %s303
      %v1108 = vmul.f32 %v1107, %v1103
      %v1109 = vmul.f32 %v1107, %v1104
      %v1110 = vsel %vm1105, %v1103, %v1108
      %v1111 = vsel %vm1106, %v1104, %v1109
      %1112 = vst [vmem:[%s300] sm:$0xff] %v1110
      %1113 = vst [vmem:[%s300 + $0x8] sm:$0xff] %v1111
      %v1114 = vsel %vm315, %v572, %v568
      %v1115 = vsel %vm316, %v574, %v570
      %v1116 = vsel %vm327, %v582, %v578
      %v1117 = vsel %vm328, %v584, %v580
      %v1118 = vsel %vm339, %v1116, %v1114
      %v1119 = vsel %vm340, %v1117, %v1115
      %v1120 = vadd.f32 %v1118, %v345
      %v1121 = vadd.f32 %v1119, %v345
      %vm1122 = vcmp.ge.f32.partialorder %v1120, 0.0
      %vm1123 = vcmp.ge.f32.partialorder %v1121, 0.0
      %v1124 = vmul.f32 %v1107, %v1120
      %v1125 = vmul.f32 %v1107, %v1121
      %v1126 = vsel %vm1122, %v1120, %v1124
      %v1127 = vsel %vm1123, %v1121, %v1125
      %s1128 = scalar_lea.vmem %s300, 16
      %1129 = vst [vmem:[%s1128] sm:$0xff] %v1126
      %1130 = vst [vmem:[%s1128 + $0x8] sm:$0xff] %v1127
      %v1131 = vsel %vm315, %v625, %v621
      %v1132 = vsel %vm316, %v627, %v623
      %v1133 = vsel %vm327, %v635, %v631
      %v1134 = vsel %vm328, %v637, %v633
      %v1135 = vsel %vm339, %v1133, %v1131
      %v1136 = vsel %vm340, %v1134, %v1132
      %v1137 = vadd.f32 %v1135, %v345
      %v1138 = vadd.f32 %v1136, %v345
      %vm1139 = vcmp.ge.f32.partialorder %v1137, 0.0
      %vm1140 = vcmp.ge.f32.partialorder %v1138, 0.0
      %v1141 = vmul.f32 %v1107, %v1137
      %v1142 = vmul.f32 %v1107, %v1138
      %v1143 = vsel %vm1139, %v1137, %v1141
      %v1144 = vsel %vm1140, %v1138, %v1142
      %s1145 = scalar_lea.vmem %s300, 32
      %1146 = vst [vmem:[%s1145] sm:$0xff] %v1143
      %1147 = vst [vmem:[%s1145 + $0x8] sm:$0xff] %v1144
      %v1148 = vsel %vm315, %v645, %v641
      %v1149 = vsel %vm316, %v647, %v643
      %v1150 = vsel %vm327, %v655, %v651
      %v1151 = vsel %vm328, %v657, %v653
      %v1152 = vsel %vm339, %v1150, %v1148
      %v1153 = vsel %vm340, %v1151, %v1149
      %v1154 = vadd.f32 %v1152, %v345
      %v1155 = vadd.f32 %v1153, %v345
      %vm1156 = vcmp.ge.f32.partialorder %v1154, 0.0
      %vm1157 = vcmp.ge.f32.partialorder %v1155, 0.0
      %v1158 = vmul.f32 %v1107, %v1154
      %v1159 = vmul.f32 %v1107, %v1155
      %v1160 = vsel %vm1156, %v1154, %v1158
      %v1161 = vsel %vm1157, %v1155, %v1159
      %s1162 = scalar_lea.vmem %s300, 48
      %1163 = vst [vmem:[%s1162] sm:$0xff] %v1160
      %1164 = vst [vmem:[%s1162 + $0x8] sm:$0xff] %v1161
      %v1165 = vsel %vm315, %v698, %v694
      %v1166 = vsel %vm316, %v700, %v696
      %v1167 = vsel %vm327, %v708, %v704
      %v1168 = vsel %vm328, %v710, %v706
      %v1169 = vsel %vm339, %v1167, %v1165
      %v1170 = vsel %vm340, %v1168, %v1166
      %v1171 = vadd.f32 %v1169, %v345
      %v1172 = vadd.f32 %v1170, %v345
      %vm1173 = vcmp.ge.f32.partialorder %v1171, 0.0
      %vm1174 = vcmp.ge.f32.partialorder %v1172, 0.0
      %v1175 = vmul.f32 %v1107, %v1171
      %v1176 = vmul.f32 %v1107, %v1172
      %v1177 = vsel %vm1173, %v1171, %v1175
      %v1178 = vsel %vm1174, %v1172, %v1176
      %s1179 = scalar_lea.vmem %s300, 64
      %1180 = vst [vmem:[%s1179] sm:$0xff] %v1177
      %1181 = vst [vmem:[%s1179 + $0x8] sm:$0xff] %v1178
      %v1182 = vsel %vm315, %v718, %v714
      %v1183 = vsel %vm316, %v720, %v716
      %v1184 = vsel %vm327, %v728, %v724
      %v1185 = vsel %vm328, %v730, %v726
      %v1186 = vsel %vm339, %v1184, %v1182
      %v1187 = vsel %vm340, %v1185, %v1183
      %v1188 = vadd.f32 %v1186, %v345
      %v1189 = vadd.f32 %v1187, %v345
      %vm1190 = vcmp.ge.f32.partialorder %v1188, 0.0
      %vm1191 = vcmp.ge.f32.partialorder %v1189, 0.0
      %v1192 = vmul.f32 %v1107, %v1188
      %v1193 = vmul.f32 %v1107, %v1189
      %v1194 = vsel %vm1190, %v1188, %v1192
      %v1195 = vsel %vm1191, %v1189, %v1193
      %s1196 = scalar_lea.vmem %s300, 80
      %1197 = vst [vmem:[%s1196] sm:$0xff] %v1194
      %1198 = vst [vmem:[%s1196 + $0x8] sm:$0xff] %v1195
      %v1199 = vsel %vm315, %v771, %v767
      %v1200 = vsel %vm316, %v773, %v769
      %v1201 = vsel %vm327, %v781, %v777
      %v1202 = vsel %vm328, %v783, %v779
      %v1203 = vsel %vm339, %v1201, %v1199
      %v1204 = vsel %vm340, %v1202, %v1200
      %v1205 = vadd.f32 %v1203, %v345
      %v1206 = vadd.f32 %v1204, %v345
      %vm1207 = vcmp.ge.f32.partialorder %v1205, 0.0
      %vm1208 = vcmp.ge.f32.partialorder %v1206, 0.0
      %v1209 = vmul.f32 %v1107, %v1205
      %v1210 = vmul.f32 %v1107, %v1206
      %v1211 = vsel %vm1207, %v1205, %v1209
      %v1212 = vsel %vm1208, %v1206, %v1210
      %s1213 = scalar_lea.vmem %s300, 96
      %1214 = vst [vmem:[%s1213] sm:$0xff] %v1211
      %1215 = vst [vmem:[%s1213 + $0x8] sm:$0xff] %v1212
      %v1216 = vsel %vm315, %v791, %v787
      %v1217 = vsel %vm316, %v793, %v789
      %v1218 = vsel %vm327, %v801, %v797
      %v1219 = vsel %vm328, %v803, %v799
      %v1220 = vsel %vm339, %v1218, %v1216
      %v1221 = vsel %vm340, %v1219, %v1217
      %v1222 = vadd.f32 %v1220, %v345
      %v1223 = vadd.f32 %v1221, %v345
      %vm1224 = vcmp.ge.f32.partialorder %v1222, 0.0
      %vm1225 = vcmp.ge.f32.partialorder %v1223, 0.0
      %v1226 = vmul.f32 %v1107, %v1222
      %v1227 = vmul.f32 %v1107, %v1223
      %v1228 = vsel %vm1224, %v1222, %v1226
      %v1229 = vsel %vm1225, %v1223, %v1227
      %s1230 = scalar_lea.vmem %s300, 112
      %1231 = vst [vmem:[%s1230] sm:$0xff] %v1228
      %1232 = vst [vmem:[%s1230 + $0x8] sm:$0xff] %v1229
      %v1233 = vsel %vm315, %v844, %v840
      %v1234 = vsel %vm316, %v846, %v842
      %v1235 = vsel %vm327, %v854, %v850
      %v1236 = vsel %vm328, %v856, %v852
      %v1237 = vsel %vm339, %v1235, %v1233
      %v1238 = vsel %vm340, %v1236, %v1234
      %v1239 = vadd.f32 %v1237, %v345
      %v1240 = vadd.f32 %v1238, %v345
      %vm1241 = vcmp.ge.f32.partialorder %v1239, 0.0
      %vm1242 = vcmp.ge.f32.partialorder %v1240, 0.0
      %v1243 = vmul.f32 %v1107, %v1239
      %v1244 = vmul.f32 %v1107, %v1240
      %v1245 = vsel %vm1241, %v1239, %v1243
      %v1246 = vsel %vm1242, %v1240, %v1244
      %s1247 = scalar_lea.vmem %s300, 128
      %1248 = vst [vmem:[%s1247] sm:$0xff] %v1245
      %1249 = vst [vmem:[%s1247 + $0x8] sm:$0xff] %v1246
      %v1250 = vsel %vm315, %v864, %v860
      %v1251 = vsel %vm316, %v866, %v862
      %v1252 = vsel %vm327, %v874, %v870
      %v1253 = vsel %vm328, %v876, %v872
      %v1254 = vsel %vm339, %v1252, %v1250
      %v1255 = vsel %vm340, %v1253, %v1251
      %v1256 = vadd.f32 %v1254, %v345
      %v1257 = vadd.f32 %v1255, %v345
      %vm1258 = vcmp.ge.f32.partialorder %v1256, 0.0
      %vm1259 = vcmp.ge.f32.partialorder %v1257, 0.0
      %v1260 = vmul.f32 %v1107, %v1256
      %v1261 = vmul.f32 %v1107, %v1257
      %v1262 = vsel %vm1258, %v1256, %v1260
      %v1263 = vsel %vm1259, %v1257, %v1261
      %s1264 = scalar_lea.vmem %s300, 144
      %1265 = vst [vmem:[%s1264] sm:$0xff] %v1262
      %1266 = vst [vmem:[%s1264 + $0x8] sm:$0xff] %v1263
      %v1267 = vsel %vm315, %v917, %v913
      %v1268 = vsel %vm316, %v919, %v915
      %v1269 = vsel %vm327, %v927, %v923
      %v1270 = vsel %vm328, %v929, %v925
      %v1271 = vsel %vm339, %v1269, %v1267
      %v1272 = vsel %vm340, %v1270, %v1268
      %v1273 = vadd.f32 %v1271, %v345
      %v1274 = vadd.f32 %v1272, %v345
      %vm1275 = vcmp.ge.f32.partialorder %v1273, 0.0
      %vm1276 = vcmp.ge.f32.partialorder %v1274, 0.0
      %v1277 = vmul.f32 %v1107, %v1273
      %v1278 = vmul.f32 %v1107, %v1274
      %v1279 = vsel %vm1275, %v1273, %v1277
      %v1280 = vsel %vm1276, %v1274, %v1278
      %s1281 = scalar_lea.vmem %s300, 160
      %1282 = vst [vmem:[%s1281] sm:$0xff] %v1279
      %1283 = vst [vmem:[%s1281 + $0x8] sm:$0xff] %v1280
      %v1284 = vsel %vm315, %v937, %v933
      %v1285 = vsel %vm316, %v939, %v935
      %v1286 = vsel %vm327, %v947, %v943
      %v1287 = vsel %vm328, %v949, %v945
      %v1288 = vsel %vm339, %v1286, %v1284
      %v1289 = vsel %vm340, %v1287, %v1285
      %v1290 = vadd.f32 %v1288, %v345
      %v1291 = vadd.f32 %v1289, %v345
      %vm1292 = vcmp.ge.f32.partialorder %v1290, 0.0
      %vm1293 = vcmp.ge.f32.partialorder %v1291, 0.0
      %v1294 = vmul.f32 %v1107, %v1290
      %v1295 = vmul.f32 %v1107, %v1291
      %v1296 = vsel %vm1292, %v1290, %v1294
      %v1297 = vsel %vm1293, %v1291, %v1295
      %s1298 = scalar_lea.vmem %s300, 176
      %1299 = vst [vmem:[%s1298] sm:$0xff] %v1296
      %1300 = vst [vmem:[%s1298 + $0x8] sm:$0xff] %v1297
      %v1301 = vsel %vm315, %v990, %v986
      %v1302 = vsel %vm316, %v992, %v988
      %v1303 = vsel %vm327, %v1000, %v996
      %v1304 = vsel %vm328, %v1002, %v998
      %v1305 = vsel %vm339, %v1303, %v1301
      %v1306 = vsel %vm340, %v1304, %v1302
      %v1307 = vadd.f32 %v1305, %v345
      %v1308 = vadd.f32 %v1306, %v345
      %vm1309 = vcmp.ge.f32.partialorder %v1307, 0.0
      %vm1310 = vcmp.ge.f32.partialorder %v1308, 0.0
      %v1311 = vmul.f32 %v1107, %v1307
      %v1312 = vmul.f32 %v1107, %v1308
      %v1313 = vsel %vm1309, %v1307, %v1311
      %v1314 = vsel %vm1310, %v1308, %v1312
      %s1315 = scalar_lea.vmem %s300, 192
      %1316 = vst [vmem:[%s1315] sm:$0xff] %v1313
      %1317 = vst [vmem:[%s1315 + $0x8] sm:$0xff] %v1314
      %v1318 = vsel %vm315, %v1010, %v1006
      %v1319 = vsel %vm316, %v1012, %v1008
      %v1320 = vsel %vm327, %v1020, %v1016
      %v1321 = vsel %vm328, %v1022, %v1018
      %v1322 = vsel %vm339, %v1320, %v1318
      %v1323 = vsel %vm340, %v1321, %v1319
      %v1324 = vadd.f32 %v1322, %v345
      %v1325 = vadd.f32 %v1323, %v345
      %vm1326 = vcmp.ge.f32.partialorder %v1324, 0.0
      %vm1327 = vcmp.ge.f32.partialorder %v1325, 0.0
      %v1328 = vmul.f32 %v1107, %v1324
      %v1329 = vmul.f32 %v1107, %v1325
      %v1330 = vsel %vm1326, %v1324, %v1328
      %v1331 = vsel %vm1327, %v1325, %v1329
      %s1332 = scalar_lea.vmem %s300, 208
      %1333 = vst [vmem:[%s1332] sm:$0xff] %v1330
      %1334 = vst [vmem:[%s1332 + $0x8] sm:$0xff] %v1331
      %v1335 = vsel %vm315, %v1063, %v1059
      %v1336 = vsel %vm316, %v1065, %v1061
      %v1337 = vsel %vm327, %v1073, %v1069
      %v1338 = vsel %vm328, %v1075, %v1071
      %v1339 = vsel %vm339, %v1337, %v1335
      %v1340 = vsel %vm340, %v1338, %v1336
      %v1341 = vadd.f32 %v1339, %v345
      %v1342 = vadd.f32 %v1340, %v345
      %vm1343 = vcmp.ge.f32.partialorder %v1341, 0.0
      %vm1344 = vcmp.ge.f32.partialorder %v1342, 0.0
      %v1345 = vmul.f32 %v1107, %v1341
      %v1346 = vmul.f32 %v1107, %v1342
      %v1347 = vsel %vm1343, %v1341, %v1345
      %v1348 = vsel %vm1344, %v1342, %v1346
      %s1349 = scalar_lea.vmem %s300, 224
      %1350 = vst [vmem:[%s1349] sm:$0xff] %v1347
      %1351 = vst [vmem:[%s1349 + $0x8] sm:$0xff] %v1348
      %v1352 = vsel %vm315, %v1083, %v1079
      %v1353 = vsel %vm316, %v1085, %v1081
      %v1354 = vsel %vm327, %v1093, %v1089
      %v1355 = vsel %vm328, %v1095, %v1091
      %v1356 = vsel %vm339, %v1354, %v1352
      %v1357 = vsel %vm340, %v1355, %v1353
      %v1358 = vadd.f32 %v1356, %v345
      %v1359 = vadd.f32 %v1357, %v345
      %vm1360 = vcmp.ge.f32.partialorder %v1358, 0.0
      %vm1361 = vcmp.ge.f32.partialorder %v1359, 0.0
      %v1362 = vmul.f32 %v1107, %v1358
      %v1363 = vmul.f32 %v1107, %v1359
      %v1364 = vsel %vm1360, %v1358, %v1362
      %v1365 = vsel %vm1361, %v1359, %v1363
      %s1366 = scalar_lea.vmem %s300, 240
      %1367 = vst [vmem:[%s1366] sm:$0xff] %v1364
      %1368 = vst [vmem:[%s1366 + $0x8] sm:$0xff] %v1365
      %s1369 = smul.u32 8, %s22
      %p1370 = scmp.lt.s32.totalorder %s21, 1
      %s1371 = scalar_select %p1370, %s21, 1
      %p1372 = scmp.lt.s32.totalorder %s1369, 7
      %s1373 = scalar_select %p1372, %s1369, 7
      %s1374 = smul.addr %s1373, 4
      %s1375 = smul.addr %s1371, 32
      %s1376 = sadd.s32 %s1374, %s1375
      %s1377 = smul.addr %s1376, 8
      %s1378 = scalar_lea.vmem %s5, %s1377
      // Predicated region
      $region41: #{daub_forward.1} parent=39 // pred_check
        %p1379 = pneg %p171
      $region42: #{daub_forward.1} parent=39 // pred_check_branch
        %1381 = sbr.rel (%p1379) target = $region44
      $region43: #{daub_forward.1} parent=39 // pred_region
        %s1382 = smul.u32 8, %s22
      $region44: #{daub_forward.1} parent=39 // pred_fallthru
        _
    $region40: #{daub_forward.1} parent=5 // pred_fallthru
      _
    %p1383 = scmp.le.s32.totalorder 2, %s12
    // Predicated region
    $region45: #{daub_forward.1} parent=5 // pred_check
      %p1384 = pneg %p1383
    $region46: #{daub_forward.1} parent=5 // pred_check_branch
      %1386 = sbr.rel (%p1384) target = $region48
    $region47: #{daub_forward.1} parent=5 // pred_region
      %s1387 = ssub.s32 %s12, 2
      // Predicated region
      $region49: #{daub_forward.1} parent=47 // pred_check
        %p1388 = pneg %p177
      $region50: #{daub_forward.1} parent=47 // pred_check_branch
        %1390 = sbr.rel (%p1388) target = $region52
      $region51: #{daub_forward.1} parent=47 // pred_region
        %s1391 = smul.u32 8, %s24
        %p1392 = scmp.lt.s32.totalorder %s23, 1
        %s1393 = scalar_select %p1392, %s23, 1
        %p1394 = scmp.lt.s32.totalorder %s1391, 7
        %s1395 = scalar_select %p1394, %s1391, 7
        %s1396 = smul.addr %s1395, 4
        %s1397 = smul.addr %s1393, 32
        %s1398 = sadd.s32 %s1396, %s1397
        %s1399 = smul.addr %s1398, 8
        %s1400 = scalar_lea.vmem %s5, %s1399
      $region52: #{daub_forward.1} parent=47 // pred_fallthru
        _
    $region48: #{daub_forward.1} parent=5 // pred_fallthru
      _
  $region6: #{daub_forward.1} parent=0 // loop_footer
    %s16 = sadd.s32 1, %s12
  $region7: #{daub_forward.1} parent=0 // loop_footer_branch
    %11 = sbr.rel target = $region3
  $region8: #{daub_forward.1} parent=0 // loop_exit
    _

</llo_original>
